<compile_context>
chip_gen: v6e
topology: v6e:2x2x1
jax: 0.10.0
libtpu: 0.0.40
codegen_flags: <defaults>
</compile_context>

<pallas_src>
import jax
import jax.numpy as jnp
from jax.experimental import pallas as pl
from jax.experimental.pallas import tpu as pltpu


# --------------------------- fused model kernel -----------------------------
def _make_fused_rnn_kernel(T, B, D_in, H, O_pad, n_layers):
    """Kernel args (in order):
         x_ref   (T*B, D_in)                      time-major, t major / b minor
         [w_ih_t (D_l, H), w_hh_t (H, H), b (1, H)] * n_layers   (pre-transposed)
         w_fc_t  (H, O_pad), b_fc (1, O_pad)
         out_ref (B, O_pad)
    """

    def kernel(*refs):
        x_ref = refs[0]
        layer_refs = refs[1:1 + 3 * n_layers]
        w_fc_ref = refs[1 + 3 * n_layers]
        b_fc_ref = refs[2 + 3 * n_layers]
        out_ref = refs[3 + 3 * n_layers]

        prev_hs = None  # previous layer's per-step hidden states: list of (B, H)
        for l in range(n_layers):
            # Weights loaded once per layer (hoisted out of the time steps),
            # already transposed so no in-kernel relayout.
            w_ih = layer_refs[3 * l][...]      # (D_l, H)
            w_hh = layer_refs[3 * l + 1][...]  # (H, H)
            b = layer_refs[3 * l + 2][...]     # (1, H)

            if l == 0:
                # Hoisted input projection + bias for ALL time steps at once:
                # one (T*B, D) x (D, H) matmul, bias folded in, no per-step
                # broadcasts on the critical path.
                pre_all = jnp.dot(x_ref[...], w_ih,
                                  preferred_element_type=jnp.float32) + b
                pre_ts = [pre_all[t * B:(t + 1) * B, :] for t in range(T)]
            else:
                # Per-step input projection from the previous layer's
                # register-resident outputs.  Each depends only on layer l-1
                # step t (not on this layer's h chain), enabling the wavefront
                # overlap across layers in the unrolled schedule.
                pre_ts = [jnp.dot(prev_hs[t], w_ih,
                                  preferred_element_type=jnp.float32) + b
                          for t in range(T)]

            hs = []
            h = jnp.tanh(pre_ts[0])  # t = 0 peeled: h0 == 0, skip h @ W_hh
            hs.append(h)
            for t in range(1, T):
                h = jnp.tanh(
                    jnp.dot(h, w_hh, preferred_element_type=jnp.float32)
                    + pre_ts[t])
                hs.append(h)
            prev_hs = hs

        # Final Linear on the last time step: h_{T-1} @ W_fc^T + b_fc.
        out = (jnp.dot(prev_hs[-1], w_fc_ref[...],
                       preferred_element_type=jnp.float32) + b_fc_ref[...])
        out_ref[...] = out.astype(out_ref.dtype)

    return kernel


# ------------------------------ wrapper --------------------------------------
def rnn_model_forward(params, x_btd):
    """x_btd: (B, T, D) batch_first like the PyTorch module. Returns (B, O)."""
    B, T, D_in = x_btd.shape
    H = params["rnn"][0][1].shape[0]
    O = params["fc_w"].shape[1]
    n_layers = len(params["rnn"])

    # Lane-dense output: pad the FC output dim to a multiple of 128 (zero
    # columns) and slice the (B, O) result off outside the kernel, so the
    # final store is an unmasked, lane-dense vst instead of vst.msk.
    O_pad = max(128, ((O + 127) // 128) * 128)
    fc_w_p = jnp.zeros((H, O_pad), jnp.float32).at[:, :O].set(params["fc_w"])
    fc_b_p = jnp.zeros((1, O_pad), jnp.float32).at[:, :O].set(params["fc_b"])

    # Time-major, flattened (T*B, D): consumed directly as the layer-0 MXU LHS
    # with no in-kernel reshape.
    x_tm = jnp.transpose(x_btd, (1, 0, 2)).reshape(T * B, D_in)

    flat_w = []
    for (w_ih_t, w_hh_t, b) in params["rnn"]:
        flat_w += [w_ih_t, w_hh_t, b]
    flat_w += [fc_w_p, fc_b_p]

    kernel = _make_fused_rnn_kernel(T, B, D_in, H, O_pad, n_layers)
    n_in = 1 + len(flat_w)

    # Advisory cost estimate for the fused kernel (t=0 peeled in recurrence).
    flops = 0
    d_prev = D_in
    for _ in range(n_layers):
        flops += 2 * T * B * d_prev * H          # input projection
        flops += 2 * (T - 1) * B * H * H         # recurrence
        d_prev = H
    flops += 2 * B * H * O_pad                   # final FC
    transc = n_layers * T * B * H                # tanh
    io_bytes = (x_tm.size + sum(int(w.size) for w in flat_w) + B * O_pad) * 4
    cost = pl.CostEstimate(flops=flops, transcendentals=transc,
                           bytes_accessed=io_bytes)

    # Explicit VMEM budget with generous margin, clamped to stay comfortably
    # within every generation's physical VMEM (64 MiB on v7x).
    vmem_limit = int(min(max(8 * io_bytes + (4 << 20), 16 << 20), 48 << 20))

    out_pad = pl.pallas_call(
        kernel,
        out_shape=jax.ShapeDtypeStruct((B, O_pad), jnp.float32),
        in_specs=[pl.BlockSpec(memory_space=pltpu.MemorySpace.VMEM)] * n_in,
        out_specs=pl.BlockSpec(memory_space=pltpu.MemorySpace.VMEM),
        compiler_params=pltpu.CompilerParams(vmem_limit_bytes=vmem_limit),
        cost_estimate=cost,
    )(x_tm, *flat_w)
    return out_pad[:, :O]


# ------------------------------ params ---------------------------------------
def init_params(key, input_dim, hidden_dim, output_dim, layers):
    """PyTorch-style uniform(-1/sqrt(H), 1/sqrt(H)) init.

    Weights are stored PRE-TRANSPOSED (contraction dim leading):
      w_ih_t: (D_in, H), w_hh_t: (H, H), b: (1, H) [= b_ih + b_hh]
      fc_w:   (H, O),    fc_b: (1, O)
    """
    params = {"rnn": []}
    k = 1.0 / (hidden_dim ** 0.5)
    for l in range(layers):
        d_in = input_dim if l == 0 else hidden_dim
        key, k1, k2, k3, k4 = jax.random.split(key, 5)
        w_ih_t = jax.random.uniform(k1, (d_in, hidden_dim), jnp.float32, -k, k)
        w_hh_t = jax.random.uniform(k2, (hidden_dim, hidden_dim), jnp.float32, -k, k)
        b_ih = jax.random.uniform(k3, (hidden_dim,), jnp.float32, -k, k)
        b_hh = jax.random.uniform(k4, (hidden_dim,), jnp.float32, -k, k)
        params["rnn"].append((w_ih_t, w_hh_t, (b_ih + b_hh).reshape(1, hidden_dim)))
    key, k1, k2 = jax.random.split(key, 3)
    params["fc_w"] = jax.random.uniform(k1, (hidden_dim, output_dim), jnp.float32, -k, k)
    params["fc_b"] = jax.random.uniform(k2, (output_dim,), jnp.float32, -k, k).reshape(1, output_dim)
    return params


# --------------------------- pure-JAX reference ------------------------------
def rnn_model_reference(params, x_btd):
    hp = jax.lax.Precision.HIGHEST
    B, T, _ = x_btd.shape
    h_seq = x_btd
    for (w_ih_t, w_hh_t, b) in params["rnn"]:
        H = w_hh_t.shape[0]
        h = jnp.zeros((B, H), jnp.float32)
        outs = []
        for t in range(T):
            h = jnp.tanh(jnp.dot(h_seq[:, t], w_ih_t, precision=hp)
                         + jnp.dot(h, w_hh_t, precision=hp) + b)
            outs.append(h)
        h_seq = jnp.stack(outs, axis=1)
    return jnp.dot(h_seq[:, -1], params["fc_w"], precision=hp) + params["fc_b"]


if __name__ == "__main__":
    # Small shapes consistent with the module's forward.
    batch, seq_len = 2, 8
    input_dim, hidden_dim, output_dim, layers = 4, 32, 3, 2

    key = jax.random.PRNGKey(0)
    key, xk, pk = jax.random.split(key, 3)
    x = jax.random.normal(xk, (batch, seq_len, input_dim), jnp.float32)
    params = init_params(pk, input_dim, hidden_dim, output_dim, layers)

    out = rnn_model_forward(params, x)
    out = jax.block_until_ready(out)
    assert out.shape == (batch, output_dim)

    ref = jax.block_until_ready(rnn_model_reference(params, x))
    assert jnp.allclose(out, ref, rtol=5e-3, atol=5e-3), (out, ref)

    print("KERNEL_OK")
</pallas_src>

<mosaic_0001>
module attributes {stable_mosaic.version = 11 : i64} {
  func.func @kernel(%arg0: memref<16x4xf32, #tpu.memory_space<vmem>>, %arg1: memref<4x32xf32, #tpu.memory_space<vmem>>, %arg2: memref<32x32xf32, #tpu.memory_space<vmem>>, %arg3: memref<1x32xf32, #tpu.memory_space<vmem>>, %arg4: memref<32x32xf32, #tpu.memory_space<vmem>>, %arg5: memref<32x32xf32, #tpu.memory_space<vmem>>, %arg6: memref<1x32xf32, #tpu.memory_space<vmem>>, %arg7: memref<32x128xf32, #tpu.memory_space<vmem>>, %arg8: memref<1x128xf32, #tpu.memory_space<vmem>>, %arg9: memref<2x128xf32, #tpu.memory_space<vmem>>) attributes {dimension_semantics = [], scalar_prefetch = 0 : i64, scratch_operands = 0 : i64, tpu.core_type = #tpu.core_type<tc>} {
    %c0 = arith.constant 0 : index
    %c0_0 = arith.constant 0 : index
    %0 = vector.load %arg1[%c0, %c0_0] : memref<4x32xf32, #tpu.memory_space<vmem>>, vector<4x32xf32>
    %c0_1 = arith.constant 0 : index
    %c0_2 = arith.constant 0 : index
    %1 = vector.load %arg2[%c0_1, %c0_2] : memref<32x32xf32, #tpu.memory_space<vmem>>, vector<32x32xf32>
    %c0_3 = arith.constant 0 : index
    %c0_4 = arith.constant 0 : index
    %2 = vector.load %arg3[%c0_3, %c0_4] : memref<1x32xf32, #tpu.memory_space<vmem>>, vector<1x32xf32>
    %c0_5 = arith.constant 0 : index
    %c0_6 = arith.constant 0 : index
    %3 = vector.load %arg0[%c0_5, %c0_6] : memref<16x4xf32, #tpu.memory_space<vmem>>, vector<16x4xf32>
    %cst = arith.constant dense<0.000000e+00> : vector<16x32xf32>
    %4 = tpu.matmul %3, %0, %cst {dimension_numbers = #tpu.dot_dimension_numbers<[1], [0], [0], [1], [0, 0, 1, 1], [], []>} : vector<16x4xf32>, vector<4x32xf32>, vector<16x32xf32> -> vector<16x32xf32>
    %5 = vector.broadcast %2 : vector<1x32xf32> to vector<16x32xf32>
    %6 = arith.addf %4, %5 : vector<16x32xf32>
    %7 = vector.extract_strided_slice %6 {offsets = [0, 0], sizes = [2, 32], strides = [1, 1]} : vector<16x32xf32> to vector<2x32xf32>
    %8 = vector.extract_strided_slice %6 {offsets = [2, 0], sizes = [2, 32], strides = [1, 1]} : vector<16x32xf32> to vector<2x32xf32>
    %9 = vector.extract_strided_slice %6 {offsets = [4, 0], sizes = [2, 32], strides = [1, 1]} : vector<16x32xf32> to vector<2x32xf32>
    %10 = vector.extract_strided_slice %6 {offsets = [6, 0], sizes = [2, 32], strides = [1, 1]} : vector<16x32xf32> to vector<2x32xf32>
    %11 = vector.extract_strided_slice %6 {offsets = [8, 0], sizes = [2, 32], strides = [1, 1]} : vector<16x32xf32> to vector<2x32xf32>
    %12 = vector.extract_strided_slice %6 {offsets = [10, 0], sizes = [2, 32], strides = [1, 1]} : vector<16x32xf32> to vector<2x32xf32>
    %13 = vector.extract_strided_slice %6 {offsets = [12, 0], sizes = [2, 32], strides = [1, 1]} : vector<16x32xf32> to vector<2x32xf32>
    %14 = vector.extract_strided_slice %6 {offsets = [14, 0], sizes = [2, 32], strides = [1, 1]} : vector<16x32xf32> to vector<2x32xf32>
    %15 = math.tanh %7 : vector<2x32xf32>
    %cst_7 = arith.constant dense<0.000000e+00> : vector<2x32xf32>
    %16 = tpu.matmul %15, %1, %cst_7 {dimension_numbers = #tpu.dot_dimension_numbers<[1], [0], [0], [1], [0, 0, 1, 1], [], []>} : vector<2x32xf32>, vector<32x32xf32>, vector<2x32xf32> -> vector<2x32xf32>
    %17 = arith.addf %16, %8 : vector<2x32xf32>
    %18 = math.tanh %17 : vector<2x32xf32>
    %cst_8 = arith.constant dense<0.000000e+00> : vector<2x32xf32>
    %19 = tpu.matmul %18, %1, %cst_8 {dimension_numbers = #tpu.dot_dimension_numbers<[1], [0], [0], [1], [0, 0, 1, 1], [], []>} : vector<2x32xf32>, vector<32x32xf32>, vector<2x32xf32> -> vector<2x32xf32>
    %20 = arith.addf %19, %9 : vector<2x32xf32>
    %21 = math.tanh %20 : vector<2x32xf32>
    %cst_9 = arith.constant dense<0.000000e+00> : vector<2x32xf32>
    %22 = tpu.matmul %21, %1, %cst_9 {dimension_numbers = #tpu.dot_dimension_numbers<[1], [0], [0], [1], [0, 0, 1, 1], [], []>} : vector<2x32xf32>, vector<32x32xf32>, vector<2x32xf32> -> vector<2x32xf32>
    %23 = arith.addf %22, %10 : vector<2x32xf32>
    %24 = math.tanh %23 : vector<2x32xf32>
    %cst_10 = arith.constant dense<0.000000e+00> : vector<2x32xf32>
    %25 = tpu.matmul %24, %1, %cst_10 {dimension_numbers = #tpu.dot_dimension_numbers<[1], [0], [0], [1], [0, 0, 1, 1], [], []>} : vector<2x32xf32>, vector<32x32xf32>, vector<2x32xf32> -> vector<2x32xf32>
    %26 = arith.addf %25, %11 : vector<2x32xf32>
    %27 = math.tanh %26 : vector<2x32xf32>
    %cst_11 = arith.constant dense<0.000000e+00> : vector<2x32xf32>
    %28 = tpu.matmul %27, %1, %cst_11 {dimension_numbers = #tpu.dot_dimension_numbers<[1], [0], [0], [1], [0, 0, 1, 1], [], []>} : vector<2x32xf32>, vector<32x32xf32>, vector<2x32xf32> -> vector<2x32xf32>
    %29 = arith.addf %28, %12 : vector<2x32xf32>
    %30 = math.tanh %29 : vector<2x32xf32>
    %cst_12 = arith.constant dense<0.000000e+00> : vector<2x32xf32>
    %31 = tpu.matmul %30, %1, %cst_12 {dimension_numbers = #tpu.dot_dimension_numbers<[1], [0], [0], [1], [0, 0, 1, 1], [], []>} : vector<2x32xf32>, vector<32x32xf32>, vector<2x32xf32> -> vector<2x32xf32>
    %32 = arith.addf %31, %13 : vector<2x32xf32>
    %33 = math.tanh %32 : vector<2x32xf32>
    %cst_13 = arith.constant dense<0.000000e+00> : vector<2x32xf32>
    %34 = tpu.matmul %33, %1, %cst_13 {dimension_numbers = #tpu.dot_dimension_numbers<[1], [0], [0], [1], [0, 0, 1, 1], [], []>} : vector<2x32xf32>, vector<32x32xf32>, vector<2x32xf32> -> vector<2x32xf32>
    %35 = arith.addf %34, %14 : vector<2x32xf32>
    %36 = math.tanh %35 : vector<2x32xf32>
    %c0_14 = arith.constant 0 : index
    %c0_15 = arith.constant 0 : index
    %37 = vector.load %arg4[%c0_14, %c0_15] : memref<32x32xf32, #tpu.memory_space<vmem>>, vector<32x32xf32>
    %c0_16 = arith.constant 0 : index
    %c0_17 = arith.constant 0 : index
    %38 = vector.load %arg5[%c0_16, %c0_17] : memref<32x32xf32, #tpu.memory_space<vmem>>, vector<32x32xf32>
    %c0_18 = arith.constant 0 : index
    %c0_19 = arith.constant 0 : index
    %39 = vector.load %arg6[%c0_18, %c0_19] : memref<1x32xf32, #tpu.memory_space<vmem>>, vector<1x32xf32>
    %cst_20 = arith.constant dense<0.000000e+00> : vector<2x32xf32>
    %40 = tpu.matmul %15, %37, %cst_20 {dimension_numbers = #tpu.dot_dimension_numbers<[1], [0], [0], [1], [0, 0, 1, 1], [], []>} : vector<2x32xf32>, vector<32x32xf32>, vector<2x32xf32> -> vector<2x32xf32>
    %41 = vector.broadcast %39 : vector<1x32xf32> to vector<2x32xf32>
    %42 = arith.addf %40, %41 : vector<2x32xf32>
    %cst_21 = arith.constant dense<0.000000e+00> : vector<2x32xf32>
    %43 = tpu.matmul %18, %37, %cst_21 {dimension_numbers = #tpu.dot_dimension_numbers<[1], [0], [0], [1], [0, 0, 1, 1], [], []>} : vector<2x32xf32>, vector<32x32xf32>, vector<2x32xf32> -> vector<2x32xf32>
    %44 = vector.broadcast %39 : vector<1x32xf32> to vector<2x32xf32>
    %45 = arith.addf %43, %44 : vector<2x32xf32>
    %cst_22 = arith.constant dense<0.000000e+00> : vector<2x32xf32>
    %46 = tpu.matmul %21, %37, %cst_22 {dimension_numbers = #tpu.dot_dimension_numbers<[1], [0], [0], [1], [0, 0, 1, 1], [], []>} : vector<2x32xf32>, vector<32x32xf32>, vector<2x32xf32> -> vector<2x32xf32>
    %47 = vector.broadcast %39 : vector<1x32xf32> to vector<2x32xf32>
    %48 = arith.addf %46, %47 : vector<2x32xf32>
    %cst_23 = arith.constant dense<0.000000e+00> : vector<2x32xf32>
    %49 = tpu.matmul %24, %37, %cst_23 {dimension_numbers = #tpu.dot_dimension_numbers<[1], [0], [0], [1], [0, 0, 1, 1], [], []>} : vector<2x32xf32>, vector<32x32xf32>, vector<2x32xf32> -> vector<2x32xf32>
    %50 = vector.broadcast %39 : vector<1x32xf32> to vector<2x32xf32>
    %51 = arith.addf %49, %50 : vector<2x32xf32>
    %cst_24 = arith.constant dense<0.000000e+00> : vector<2x32xf32>
    %52 = tpu.matmul %27, %37, %cst_24 {dimension_numbers = #tpu.dot_dimension_numbers<[1], [0], [0], [1], [0, 0, 1, 1], [], []>} : vector<2x32xf32>, vector<32x32xf32>, vector<2x32xf32> -> vector<2x32xf32>
    %53 = vector.broadcast %39 : vector<1x32xf32> to vector<2x32xf32>
    %54 = arith.addf %52, %53 : vector<2x32xf32>
    %cst_25 = arith.constant dense<0.000000e+00> : vector<2x32xf32>
    %55 = tpu.matmul %30, %37, %cst_25 {dimension_numbers = #tpu.dot_dimension_numbers<[1], [0], [0], [1], [0, 0, 1, 1], [], []>} : vector<2x32xf32>, vector<32x32xf32>, vector<2x32xf32> -> vector<2x32xf32>
    %56 = vector.broadcast %39 : vector<1x32xf32> to vector<2x32xf32>
    %57 = arith.addf %55, %56 : vector<2x32xf32>
    %cst_26 = arith.constant dense<0.000000e+00> : vector<2x32xf32>
    %58 = tpu.matmul %33, %37, %cst_26 {dimension_numbers = #tpu.dot_dimension_numbers<[1], [0], [0], [1], [0, 0, 1, 1], [], []>} : vector<2x32xf32>, vector<32x32xf32>, vector<2x32xf32> -> vector<2x32xf32>
    %59 = vector.broadcast %39 : vector<1x32xf32> to vector<2x32xf32>
    %60 = arith.addf %58, %59 : vector<2x32xf32>
    %cst_27 = arith.constant dense<0.000000e+00> : vector<2x32xf32>
    %61 = tpu.matmul %36, %37, %cst_27 {dimension_numbers = #tpu.dot_dimension_numbers<[1], [0], [0], [1], [0, 0, 1, 1], [], []>} : vector<2x32xf32>, vector<32x32xf32>, vector<2x32xf32> -> vector<2x32xf32>
    %62 = vector.broadcast %39 : vector<1x32xf32> to vector<2x32xf32>
    %63 = arith.addf %61, %62 : vector<2x32xf32>
    %64 = math.tanh %42 : vector<2x32xf32>
    %cst_28 = arith.constant dense<0.000000e+00> : vector<2x32xf32>
    %65 = tpu.matmul %64, %38, %cst_28 {dimension_numbers = #tpu.dot_dimension_numbers<[1], [0], [0], [1], [0, 0, 1, 1], [], []>} : vector<2x32xf32>, vector<32x32xf32>, vector<2x32xf32> -> vector<2x32xf32>
    %66 = arith.addf %65, %45 : vector<2x32xf32>
    %67 = math.tanh %66 : vector<2x32xf32>
    %cst_29 = arith.constant dense<0.000000e+00> : vector<2x32xf32>
    %68 = tpu.matmul %67, %38, %cst_29 {dimension_numbers = #tpu.dot_dimension_numbers<[1], [0], [0], [1], [0, 0, 1, 1], [], []>} : vector<2x32xf32>, vector<32x32xf32>, vector<2x32xf32> -> vector<2x32xf32>
    %69 = arith.addf %68, %48 : vector<2x32xf32>
    %70 = math.tanh %69 : vector<2x32xf32>
    %cst_30 = arith.constant dense<0.000000e+00> : vector<2x32xf32>
    %71 = tpu.matmul %70, %38, %cst_30 {dimension_numbers = #tpu.dot_dimension_numbers<[1], [0], [0], [1], [0, 0, 1, 1], [], []>} : vector<2x32xf32>, vector<32x32xf32>, vector<2x32xf32> -> vector<2x32xf32>
    %72 = arith.addf %71, %51 : vector<2x32xf32>
    %73 = math.tanh %72 : vector<2x32xf32>
    %cst_31 = arith.constant dense<0.000000e+00> : vector<2x32xf32>
    %74 = tpu.matmul %73, %38, %cst_31 {dimension_numbers = #tpu.dot_dimension_numbers<[1], [0], [0], [1], [0, 0, 1, 1], [], []>} : vector<2x32xf32>, vector<32x32xf32>, vector<2x32xf32> -> vector<2x32xf32>
    %75 = arith.addf %74, %54 : vector<2x32xf32>
    %76 = math.tanh %75 : vector<2x32xf32>
    %cst_32 = arith.constant dense<0.000000e+00> : vector<2x32xf32>
    %77 = tpu.matmul %76, %38, %cst_32 {dimension_numbers = #tpu.dot_dimension_numbers<[1], [0], [0], [1], [0, 0, 1, 1], [], []>} : vector<2x32xf32>, vector<32x32xf32>, vector<2x32xf32> -> vector<2x32xf32>
    %78 = arith.addf %77, %57 : vector<2x32xf32>
    %79 = math.tanh %78 : vector<2x32xf32>
    %cst_33 = arith.constant dense<0.000000e+00> : vector<2x32xf32>
    %80 = tpu.matmul %79, %38, %cst_33 {dimension_numbers = #tpu.dot_dimension_numbers<[1], [0], [0], [1], [0, 0, 1, 1], [], []>} : vector<2x32xf32>, vector<32x32xf32>, vector<2x32xf32> -> vector<2x32xf32>
    %81 = arith.addf %80, %60 : vector<2x32xf32>
    %82 = math.tanh %81 : vector<2x32xf32>
    %cst_34 = arith.constant dense<0.000000e+00> : vector<2x32xf32>
    %83 = tpu.matmul %82, %38, %cst_34 {dimension_numbers = #tpu.dot_dimension_numbers<[1], [0], [0], [1], [0, 0, 1, 1], [], []>} : vector<2x32xf32>, vector<32x32xf32>, vector<2x32xf32> -> vector<2x32xf32>
    %84 = arith.addf %83, %63 : vector<2x32xf32>
    %85 = math.tanh %84 : vector<2x32xf32>
    %c0_35 = arith.constant 0 : index
    %c0_36 = arith.constant 0 : index
    %86 = vector.load %arg7[%c0_35, %c0_36] : memref<32x128xf32, #tpu.memory_space<vmem>>, vector<32x128xf32>
    %cst_37 = arith.constant dense<0.000000e+00> : vector<2x128xf32>
    %87 = tpu.matmul %85, %86, %cst_37 {dimension_numbers = #tpu.dot_dimension_numbers<[1], [0], [0], [1], [0, 0, 1, 1], [], []>} : vector<2x32xf32>, vector<32x128xf32>, vector<2x128xf32> -> vector<2x128xf32>
    %c0_38 = arith.constant 0 : index
    %c0_39 = arith.constant 0 : index
    %88 = vector.load %arg8[%c0_38, %c0_39] : memref<1x128xf32, #tpu.memory_space<vmem>>, vector<1x128xf32>
    %89 = vector.broadcast %88 : vector<1x128xf32> to vector<2x128xf32>
    %90 = arith.addf %87, %89 : vector<2x128xf32>
    %c0_40 = arith.constant 0 : index
    %c0_41 = arith.constant 0 : index
    %91 = vector.load %arg9[%c0_40, %c0_41] : memref<2x128xf32, #tpu.memory_space<vmem>>, vector<2x128xf32>
    tpu.vector_store %arg9[%c0_40, %c0_41], %90 {strides = array<i32>} : memref<2x128xf32, #tpu.memory_space<vmem>>, vector<2x128xf32>,
    return
  }
}

</mosaic_0001>

<llo_original>
// kernel: tpu_custom_call.1
$region0: #{tpu_custom_call.1}
  #allocation0 [shape = 'u32[]', space=smem, size = 0x4, offset = 0x4, fixed_abs, tag = 'smem constant byte address 0x4 - core index']
  #allocation1 [shape = 'u32[144,128]{1,0:T(1,128)}', space=vmem, size = 0x12000, scoped, tag = 'internal scratch']
  %s0 = inlined_call_operand.vmem [shape: f32[16,4], index: 0, kind: input, shape index: {}]
  %s1 = inlined_call_operand.hbm [shape: f32[4,32], index: 1, kind: input, shape index: {}]
  %s2 = inlined_call_operand.hbm [shape: f32[32,32], index: 2, kind: input, shape index: {}]
  %s3 = inlined_call_operand.hbm [shape: f32[1,32], index: 3, kind: input, shape index: {}]
  %s4 = inlined_call_operand.hbm [shape: f32[32,32], index: 4, kind: input, shape index: {}]
  %s5 = inlined_call_operand.hbm [shape: f32[32,32], index: 5, kind: input, shape index: {}]
  %s6 = inlined_call_operand.hbm [shape: f32[1,32], index: 6, kind: input, shape index: {}]
  %s7 = inlined_call_operand.vmem [shape: f32[32,128], index: 7, kind: input, shape index: {}]
  %s8 = inlined_call_operand.vmem [shape: f32[1,128], index: 8, kind: input, shape index: {}]
  %s9 = inlined_call_operand.hbm [shape: f32[2,128], index: 9, kind: output, shape index: {}]
  %s10 = sld [smem:[#allocation0]]
  $region70: #{tpu_custom_call.1} parent=0
    _
  %s12 = ssub.s32 1, %s10
  %s13 = scalar_select 0, %s12, %s10
  $region1: #{tpu_custom_call.1} parent=0
    #allocation2 [shape = 'u8[2048]{0}', space=vmem, size = 0x800, scoped, tag = 'input window, operand 1, single buffered']
    #allocation3 [shape = 's32[1]{0}', space=sflag, size = 0x4, scoped, tag = 'scoped memory for tpu_custom_call.1']
    #allocation4 [shape = 's32[1]{0}', space=sflag, size = 0x4, scoped, tag = 'scoped memory for tpu_custom_call.1']
    #allocation5 [shape = 'u8[16384]{0}', space=vmem, size = 0x4000, scoped, tag = 'input window, operand 2, single buffered']
    #allocation6 [shape = 's32[1]{0}', space=sflag, size = 0x4, scoped, tag = 'scoped memory for tpu_custom_call.1']
    #allocation7 [shape = 'u8[512]{0}', space=vmem, size = 0x400, scoped, tag = 'input window, operand 3, single buffered']
    #allocation8 [shape = 'u8[16384]{0}', space=vmem, size = 0x4000, scoped, tag = 'input window, operand 4, single buffered']
    #allocation9 [shape = 's32[1]{0}', space=sflag, size = 0x4, scoped, tag = 'scoped memory for tpu_custom_call.1']
    #allocation10 [shape = 'u8[16384]{0}', space=vmem, size = 0x4000, scoped, tag = 'input window, operand 5, single buffered']
    #allocation11 [shape = 'u8[512]{0}', space=vmem, size = 0x400, scoped, tag = 'input window, operand 6, single buffered']
    #allocation12 [shape = 's32[1]{0}', space=sflag, size = 0x4, scoped, tag = 'scoped memory for tpu_custom_call.1']
    #allocation13 [shape = 'u8[1024]{0}', space=vmem, size = 0x400, scoped, tag = 'output window, operand 0, single buffered']
    %14 = vsyncpa [#allocation3], 0
    %15 = vsyncpa [#allocation6], 0
    %16 = vsyncpa [#allocation9], 0
    %17 = vsyncpa [#allocation12], 0
    %18 = vsyncpa [#allocation4], 0
    // Predicated region
    $region2: #{tpu_custom_call.1} parent=1 // pred_check
      _
    $region3: #{tpu_custom_call.1} parent=1 // pred_check_branch
      %20 = sbr.rel (0) target = $region5
    $region4: #{tpu_custom_call.1} parent=1 // pred_region
      _
    $region5: #{tpu_custom_call.1} parent=1 // pred_fallthru
      _
    // Predicated region
    $region6: #{tpu_custom_call.1} parent=1 // pred_check
      _
    $region7: #{tpu_custom_call.1} parent=1 // pred_check_branch
      %22 = sbr.rel (0) target = $region9
    $region8: #{tpu_custom_call.1} parent=1 // pred_region
      %s24 = ssub.s32 64, 64
      %25 = vsyncadd [#allocation3], %s24
      %s27 = sshll.u32 [#allocation2], 4
      %s28 = int_to_ptr.vmem [resolvable:$true] %s27
      %30 = dma.hbm_to_vmem [thread:$0]  %s1, 64, %s28, [#allocation3]
    $region9: #{tpu_custom_call.1} parent=1 // pred_fallthru
      _
    // Predicated region
    $region10: #{tpu_custom_call.1} parent=1 // pred_check
      _
    $region11: #{tpu_custom_call.1} parent=1 // pred_check_branch
      %32 = sbr.rel (0) target = $region13
    $region12: #{tpu_custom_call.1} parent=1 // pred_region
      %s34 = ssub.s32 512, 512
      %35 = vsyncadd [#allocation6], %s34
      %s36 = sshll.u32 [#allocation5], 4
      %s37 = int_to_ptr.vmem [resolvable:$true] %s36
      %42 = dma.hbm_to_vmem [thread:$0]  %s2, 512, %s37, [#allocation6], 128, 128, 8
    $region13: #{tpu_custom_call.1} parent=1 // pred_fallthru
      _
    // Predicated region
    $region14: #{tpu_custom_call.1} parent=1 // pred_check
      _
    $region15: #{tpu_custom_call.1} parent=1 // pred_check_branch
      %44 = sbr.rel (0) target = $region17
    $region16: #{tpu_custom_call.1} parent=1 // pred_region
      %s46 = ssub.s32 16, 16
      %47 = vsyncadd [#allocation6], %s46
      %s49 = sshll.u32 [#allocation7], 4
      %s50 = int_to_ptr.vmem [resolvable:$true] %s49
      %52 = dma.hbm_to_vmem [thread:$0]  %s3, 16, %s50, [#allocation6]
    $region17: #{tpu_custom_call.1} parent=1 // pred_fallthru
      _
    // Predicated region
    $region18: #{tpu_custom_call.1} parent=1 // pred_check
      _
    $region19: #{tpu_custom_call.1} parent=1 // pred_check_branch
      %54 = sbr.rel (0) target = $region21
    $region20: #{tpu_custom_call.1} parent=1 // pred_region
      %s56 = ssub.s32 512, 512
      %57 = vsyncadd [#allocation9], %s56
      %s58 = sshll.u32 [#allocation8], 4
      %s59 = int_to_ptr.vmem [resolvable:$true] %s58
      %64 = dma.hbm_to_vmem [thread:$0]  %s4, 512, %s59, [#allocation9], 128, 128, 8
    $region21: #{tpu_custom_call.1} parent=1 // pred_fallthru
      _
    // Predicated region
    $region22: #{tpu_custom_call.1} parent=1 // pred_check
      _
    $region23: #{tpu_custom_call.1} parent=1 // pred_check_branch
      %66 = sbr.rel (0) target = $region25
    $region24: #{tpu_custom_call.1} parent=1 // pred_region
      %s68 = ssub.s32 512, 512
      %69 = vsyncadd [#allocation9], %s68
      %s70 = sshll.u32 [#allocation10], 4
      %s71 = int_to_ptr.vmem [resolvable:$true] %s70
      %76 = dma.hbm_to_vmem [thread:$0]  %s5, 512, %s71, [#allocation9], 128, 128, 8
    $region25: #{tpu_custom_call.1} parent=1 // pred_fallthru
      _
    // Predicated region
    $region26: #{tpu_custom_call.1} parent=1 // pred_check
      _
    $region27: #{tpu_custom_call.1} parent=1 // pred_check_branch
      %78 = sbr.rel (0) target = $region29
    $region28: #{tpu_custom_call.1} parent=1 // pred_region
      %s80 = ssub.s32 16, 16
      %81 = vsyncadd [#allocation12], %s80
      %s83 = sshll.u32 [#allocation11], 4
      %s84 = int_to_ptr.vmem [resolvable:$true] %s83
      %86 = dma.hbm_to_vmem [thread:$0]  %s6, 16, %s84, [#allocation12]
    $region29: #{tpu_custom_call.1} parent=1 // pred_fallthru
      _
    // Predicated region
    $region30: #{tpu_custom_call.1} parent=1 // pred_check
      _
    $region31: #{tpu_custom_call.1} parent=1 // pred_check_branch
      %88 = sbr.rel (0) target = $region33
    $region32: #{tpu_custom_call.1} parent=1 // pred_region
      _
    $region33: #{tpu_custom_call.1} parent=1 // pred_fallthru
      _
    // Predicated region
    $region34: #{tpu_custom_call.1} parent=1 // pred_check
      _
    $region35: #{tpu_custom_call.1} parent=1 // pred_check_branch
      %90 = sbr.rel (0) target = $region37
    $region36: #{tpu_custom_call.1} parent=1 // pred_region
      _
    $region37: #{tpu_custom_call.1} parent=1 // pred_fallthru
      _
    // Predicated region
    $region38: #{tpu_custom_call.1} parent=1 // pred_check
      _
    $region39: #{tpu_custom_call.1} parent=1 // pred_check_branch
      %92 = sbr.rel (0) target = $region41
    $region40: #{tpu_custom_call.1} parent=1 // pred_region
      %93 = dma.done [#allocation3], 64
    $region41: #{tpu_custom_call.1} parent=1 // pred_fallthru
      _
    // Predicated region
    $region42: #{tpu_custom_call.1} parent=1 // pred_check
      _
    $region43: #{tpu_custom_call.1} parent=1 // pred_check_branch
      %95 = sbr.rel (0) target = $region45
    $region44: #{tpu_custom_call.1} parent=1 // pred_region
      %96 = dma.done [#allocation6], 512
    $region45: #{tpu_custom_call.1} parent=1 // pred_fallthru
      _
    // Predicated region
    $region46: #{tpu_custom_call.1} parent=1 // pred_check
      _
    $region47: #{tpu_custom_call.1} parent=1 // pred_check_branch
      %98 = sbr.rel (0) target = $region49
    $region48: #{tpu_custom_call.1} parent=1 // pred_region
      %99 = dma.done [#allocation6], 16
    $region49: #{tpu_custom_call.1} parent=1 // pred_fallthru
      _
    // Predicated region
    $region50: #{tpu_custom_call.1} parent=1 // pred_check
      _
    $region51: #{tpu_custom_call.1} parent=1 // pred_check_branch
      %101 = sbr.rel (0) target = $region53
    $region52: #{tpu_custom_call.1} parent=1 // pred_region
      %102 = dma.done [#allocation9], 512
    $region53: #{tpu_custom_call.1} parent=1 // pred_fallthru
      _
    // Predicated region
    $region54: #{tpu_custom_call.1} parent=1 // pred_check
      _
    $region55: #{tpu_custom_call.1} parent=1 // pred_check_branch
      %104 = sbr.rel (0) target = $region57
    $region56: #{tpu_custom_call.1} parent=1 // pred_region
      %105 = dma.done [#allocation9], 512
    $region57: #{tpu_custom_call.1} parent=1 // pred_fallthru
      _
    // Predicated region
    $region58: #{tpu_custom_call.1} parent=1 // pred_check
      _
    $region59: #{tpu_custom_call.1} parent=1 // pred_check_branch
      %107 = sbr.rel (0) target = $region61
    $region60: #{tpu_custom_call.1} parent=1 // pred_region
      %108 = dma.done [#allocation12], 16
    $region61: #{tpu_custom_call.1} parent=1 // pred_fallthru
      _
    %v109 = vld [vmem:[#allocation2] sm:$0xf]
    %v110 = vld [vmem:[#allocation5] sm:$0xff]
    %v111 = vld [vmem:[#allocation5 + $0x8] sm:$0xff]
    %v112 = vld [vmem:[#allocation5 + $0x10] sm:$0xff]
    %v113 = vld [vmem:[#allocation5 + $0x18] sm:$0xff]
    %v114 = vld [vmem:[#allocation7] sm:$0x1]
    %v115 = vld [vmem:[%s0] sm:$0xff]
    %v116 = vld [vmem:[%s0 + $0x8] sm:$0xff]
    %v118 = vlaneseq
    %v119 = vshrl.u32 %v118, 7
    %v120 = vsub.s32 0, %v119
    %v121 = vrot.slane %v114, %v120
    %vm123 = vcmask 31744
    %v125 = vsel %vm123, %v115, 0
    %v128 = vsel %vm123, %v116, 0
    %vm130 = vcmask 1043456
    %v132 = vsel %vm130, %v109, 0
    %134 = vmatprep.subr.mxu0 0.0
    %135 = vmatpush1.msra.mxu0 0.0
    %136 = vmatprep.subr.mxu0 0.0
    %137 = vmatpush1.msra.mxu0 0.0
    %138 = vmatprep.subr.mxu0 0.0
    %139 = vmatpush1.msra.mxu0 0.0
    %140 = vmatprep.subr.mxu0 0.0
    %141 = vmatpush1.msra.mxu0 0.0
    %142 = vmatprep.subr.mxu0 0.0
    %143 = vmatpush1.msra.mxu0 0.0
    %144 = vmatprep.subr.mxu0 0.0
    %145 = vmatpush1.msra.mxu0 0.0
    %146 = vmatprep.subr.mxu0 0.0
    %147 = vmatpush1.msra.mxu0 0.0
    %148 = vmatprep.subr.mxu0 0.0
    %149 = vmatpush1.msra.mxu0 0.0
    %150 = vmatprep.subr.mxu0 0.0
    %151 = vmatpush1.msra.mxu0 0.0
    %152 = vmatprep.subr.mxu0 0.0
    %153 = vmatpush1.msra.mxu0 0.0
    %154 = vmatprep.subr.mxu0 0.0
    %155 = vmatpush1.msra.mxu0 0.0
    %156 = vmatprep.subr.mxu0 0.0
    %157 = vmatpush1.msra.mxu0 0.0
    %158 = vmatprep.subr.mxu0 0.0
    %159 = vmatpush1.msra.mxu0 0.0
    %160 = vmatprep.subr.mxu0 0.0
    %161 = vmatpush1.msra.mxu0 0.0
    %162 = vmatprep.subr.mxu0 0.0
    %163 = vmatpush1.msra.mxu0 0.0
    %164 = vmatprep.subr.mxu0 0.0
    %165 = vmatpush1.msra.mxu0 %v132
    %166 = vmatprep.subr.mxu0 0.0
    %167 = vmatpush2.msra.mxu0 0.0
    %168 = vmatprep.subr.mxu0 0.0
    %169 = vmatpush2.msra.mxu0 0.0
    %170 = vmatprep.subr.mxu0 0.0
    %171 = vmatpush2.msra.mxu0 0.0
    %172 = vmatprep.subr.mxu0 0.0
    %173 = vmatpush2.msra.mxu0 0.0
    %174 = vmatprep.subr.mxu0 0.0
    %175 = vmatpush2.msra.mxu0 0.0
    %176 = vmatprep.subr.mxu0 0.0
    %177 = vmatpush2.msra.mxu0 0.0
    %178 = vmatprep.subr.mxu0 0.0
    %179 = vmatpush2.msra.mxu0 0.0
    %180 = vmatprep.subr.mxu0 0.0
    %181 = vmatpush2.msra.mxu0 0.0
    %182 = vmatprep.subr.mxu0 0.0
    %183 = vmatpush2.msra.mxu0 0.0
    %184 = vmatprep.subr.mxu0 0.0
    %185 = vmatpush2.msra.mxu0 0.0
    %186 = vmatprep.subr.mxu0 0.0
    %187 = vmatpush2.msra.mxu0 0.0
    %188 = vmatprep.subr.mxu0 0.0
    %189 = vmatpush2.msra.mxu0 0.0
    %190 = vmatprep.subr.mxu0 0.0
    %191 = vmatpush2.msra.mxu0 0.0
    %192 = vmatprep.subr.mxu0 0.0
    %193 = vmatpush2.msra.mxu0 0.0
    %194 = vmatprep.subr.mxu0 0.0
    %195 = vmatpush2.msra.mxu0 0.0
    %196 = vmatprep.subr.mxu0 0.0
    %197 = vmatpush2.msra.mxu0 0.0
    %198 = vmatprep.mubr.f32.mxu0 0.0
    %199 = vmatmul.mubr.f32.gmra.mxu0 %v125
    %v200 = vpop.f32.mrf.mxu0
    %v201 = vadd.f32 %v121, %v200
    %v202 = vpop.f32.mrf.mxu0
    %203 = vmatprep.mubr.f32.mxu0 0.0
    %204 = vmatmul.mubr.f32.gmra.mxu0 %v128
    %v205 = vpop.f32.mrf.mxu0
    %v206 = vadd.f32 %v121, %v205
    %v207 = vpop.f32.mrf.mxu0
    %208 = vdwg.mxu0
    %v209 = vtanh.pop %v201
    %v211 = vrot.slane %v201, 2
    %vm213 = vcmask 261120
    %v215 = vsel %vm213, %v209, 0
    %217 = vmatprep.subr.mxu0 0.0
    %218 = vmatpush1.msra.mxu0 0.0
    %219 = vmatprep.subr.mxu0 0.0
    %220 = vmatpush1.msra.mxu0 0.0
    %221 = vmatprep.subr.mxu0 0.0
    %222 = vmatpush1.msra.mxu0 0.0
    %223 = vmatprep.subr.mxu0 0.0
    %224 = vmatpush1.msra.mxu0 0.0
    %225 = vmatprep.subr.mxu0 0.0
    %226 = vmatpush1.msra.mxu0 0.0
    %227 = vmatprep.subr.mxu0 0.0
    %228 = vmatpush1.msra.mxu0 0.0
    %229 = vmatprep.subr.mxu0 0.0
    %230 = vmatpush1.msra.mxu0 0.0
    %231 = vmatprep.subr.mxu0 0.0
    %232 = vmatpush1.msra.mxu0 0.0
    %233 = vmatprep.subr.mxu0 0.0
    %234 = vmatpush1.msra.mxu0 0.0
    %235 = vmatprep.subr.mxu0 0.0
    %236 = vmatpush1.msra.mxu0 0.0
    %237 = vmatprep.subr.mxu0 0.0
    %238 = vmatpush1.msra.mxu0 0.0
    %239 = vmatprep.subr.mxu0 0.0
    %240 = vmatpush1.msra.mxu0 0.0
    %241 = vmatprep.subr.mxu0 0.0
    %242 = vmatpush1.msra.mxu0 %v113
    %243 = vmatprep.subr.mxu0 0.0
    %244 = vmatpush1.msra.mxu0 %v112
    %245 = vmatprep.subr.mxu0 0.0
    %246 = vmatpush1.msra.mxu0 %v111
    %247 = vmatprep.subr.mxu0 0.0
    %248 = vmatpush1.msra.mxu0 %v110
    %249 = vmatprep.subr.mxu0 0.0
    %250 = vmatpush2.msra.mxu0 0.0
    %251 = vmatprep.subr.mxu0 0.0
    %252 = vmatpush2.msra.mxu0 0.0
    %253 = vmatprep.subr.mxu0 0.0
    %254 = vmatpush2.msra.mxu0 0.0
    %255 = vmatprep.subr.mxu0 0.0
    %256 = vmatpush2.msra.mxu0 0.0
    %257 = vmatprep.subr.mxu0 0.0
    %258 = vmatpush2.msra.mxu0 0.0
    %259 = vmatprep.subr.mxu0 0.0
    %260 = vmatpush2.msra.mxu0 0.0
    %261 = vmatprep.subr.mxu0 0.0
    %262 = vmatpush2.msra.mxu0 0.0
    %263 = vmatprep.subr.mxu0 0.0
    %264 = vmatpush2.msra.mxu0 0.0
    %265 = vmatprep.subr.mxu0 0.0
    %266 = vmatpush2.msra.mxu0 0.0
    %267 = vmatprep.subr.mxu0 0.0
    %268 = vmatpush2.msra.mxu0 0.0
    %269 = vmatprep.subr.mxu0 0.0
    %270 = vmatpush2.msra.mxu0 0.0
    %271 = vmatprep.subr.mxu0 0.0
    %272 = vmatpush2.msra.mxu0 0.0
    %273 = vmatprep.subr.mxu0 0.0
    %274 = vmatpush2.msra.mxu0 0.0
    %275 = vmatprep.subr.mxu0 0.0
    %276 = vmatpush2.msra.mxu0 0.0
    %277 = vmatprep.subr.mxu0 0.0
    %278 = vmatpush2.msra.mxu0 0.0
    %279 = vmatprep.subr.mxu0 0.0
    %280 = vmatpush2.msra.mxu0 0.0
    %281 = vmatprep.mubr.f32.mxu0 0.0
    %282 = vmatmul.mubr.f32.gmra.mxu0 %v215
    %v283 = vpop.f32.mrf.mxu0
    %v284 = vadd.f32 %v211, %v283
    %v285 = vpop.f32.mrf.mxu0
    %286 = vdwg.mxu0
    %v287 = vtanh.pop %v284
    %v288 = vrot.slane %v201, 4
    %v291 = vsel %vm213, %v287, 0
    %293 = vmatprep.subr.mxu0 0.0
    %294 = vmatpush1.msra.mxu0 0.0
    %295 = vmatprep.subr.mxu0 0.0
    %296 = vmatpush1.msra.mxu0 0.0
    %297 = vmatprep.subr.mxu0 0.0
    %298 = vmatpush1.msra.mxu0 0.0
    %299 = vmatprep.subr.mxu0 0.0
    %300 = vmatpush1.msra.mxu0 0.0
    %301 = vmatprep.subr.mxu0 0.0
    %302 = vmatpush1.msra.mxu0 0.0
    %303 = vmatprep.subr.mxu0 0.0
    %304 = vmatpush1.msra.mxu0 0.0
    %305 = vmatprep.subr.mxu0 0.0
    %306 = vmatpush1.msra.mxu0 0.0
    %307 = vmatprep.subr.mxu0 0.0
    %308 = vmatpush1.msra.mxu0 0.0
    %309 = vmatprep.subr.mxu0 0.0
    %310 = vmatpush1.msra.mxu0 0.0
    %311 = vmatprep.subr.mxu0 0.0
    %312 = vmatpush1.msra.mxu0 0.0
    %313 = vmatprep.subr.mxu0 0.0
    %314 = vmatpush1.msra.mxu0 0.0
    %315 = vmatprep.subr.mxu0 0.0
    %316 = vmatpush1.msra.mxu0 0.0
    %317 = vmatprep.subr.mxu0 0.0
    %318 = vmatpush1.msra.mxu0 %v113
    %319 = vmatprep.subr.mxu0 0.0
    %320 = vmatpush1.msra.mxu0 %v112
    %321 = vmatprep.subr.mxu0 0.0
    %322 = vmatpush1.msra.mxu0 %v111
    %323 = vmatprep.subr.mxu0 0.0
    %324 = vmatpush1.msra.mxu0 %v110
    %325 = vmatprep.subr.mxu0 0.0
    %326 = vmatpush2.msra.mxu0 0.0
    %327 = vmatprep.subr.mxu0 0.0
    %328 = vmatpush2.msra.mxu0 0.0
    %329 = vmatprep.subr.mxu0 0.0
    %330 = vmatpush2.msra.mxu0 0.0
    %331 = vmatprep.subr.mxu0 0.0
    %332 = vmatpush2.msra.mxu0 0.0
    %333 = vmatprep.subr.mxu0 0.0
    %334 = vmatpush2.msra.mxu0 0.0
    %335 = vmatprep.subr.mxu0 0.0
    %336 = vmatpush2.msra.mxu0 0.0
    %337 = vmatprep.subr.mxu0 0.0
    %338 = vmatpush2.msra.mxu0 0.0
    %339 = vmatprep.subr.mxu0 0.0
    %340 = vmatpush2.msra.mxu0 0.0
    %341 = vmatprep.subr.mxu0 0.0
    %342 = vmatpush2.msra.mxu0 0.0
    %343 = vmatprep.subr.mxu0 0.0
    %344 = vmatpush2.msra.mxu0 0.0
    %345 = vmatprep.subr.mxu0 0.0
    %346 = vmatpush2.msra.mxu0 0.0
    %347 = vmatprep.subr.mxu0 0.0
    %348 = vmatpush2.msra.mxu0 0.0
    %349 = vmatprep.subr.mxu0 0.0
    %350 = vmatpush2.msra.mxu0 0.0
    %351 = vmatprep.subr.mxu0 0.0
    %352 = vmatpush2.msra.mxu0 0.0
    %353 = vmatprep.subr.mxu0 0.0
    %354 = vmatpush2.msra.mxu0 0.0
    %355 = vmatprep.subr.mxu0 0.0
    %356 = vmatpush2.msra.mxu0 0.0
    %357 = vmatprep.mubr.f32.mxu0 0.0
    %358 = vmatmul.mubr.f32.gmra.mxu0 %v291
    %v359 = vpop.f32.mrf.mxu0
    %v360 = vadd.f32 %v288, %v359
    %v361 = vpop.f32.mrf.mxu0
    %362 = vdwg.mxu0
    %v363 = vtanh.pop %v360
    %v364 = vrot.slane %v201, 6
    %v367 = vsel %vm213, %v363, 0
    %369 = vmatprep.subr.mxu0 0.0
    %370 = vmatpush1.msra.mxu0 0.0
    %371 = vmatprep.subr.mxu0 0.0
    %372 = vmatpush1.msra.mxu0 0.0
    %373 = vmatprep.subr.mxu0 0.0
    %374 = vmatpush1.msra.mxu0 0.0
    %375 = vmatprep.subr.mxu0 0.0
    %376 = vmatpush1.msra.mxu0 0.0
    %377 = vmatprep.subr.mxu0 0.0
    %378 = vmatpush1.msra.mxu0 0.0
    %379 = vmatprep.subr.mxu0 0.0
    %380 = vmatpush1.msra.mxu0 0.0
    %381 = vmatprep.subr.mxu0 0.0
    %382 = vmatpush1.msra.mxu0 0.0
    %383 = vmatprep.subr.mxu0 0.0
    %384 = vmatpush1.msra.mxu0 0.0
    %385 = vmatprep.subr.mxu0 0.0
    %386 = vmatpush1.msra.mxu0 0.0
    %387 = vmatprep.subr.mxu0 0.0
    %388 = vmatpush1.msra.mxu0 0.0
    %389 = vmatprep.subr.mxu0 0.0
    %390 = vmatpush1.msra.mxu0 0.0
    %391 = vmatprep.subr.mxu0 0.0
    %392 = vmatpush1.msra.mxu0 0.0
    %393 = vmatprep.subr.mxu0 0.0
    %394 = vmatpush1.msra.mxu0 %v113
    %395 = vmatprep.subr.mxu0 0.0
    %396 = vmatpush1.msra.mxu0 %v112
    %397 = vmatprep.subr.mxu0 0.0
    %398 = vmatpush1.msra.mxu0 %v111
    %399 = vmatprep.subr.mxu0 0.0
    %400 = vmatpush1.msra.mxu0 %v110
    %401 = vmatprep.subr.mxu0 0.0
    %402 = vmatpush2.msra.mxu0 0.0
    %403 = vmatprep.subr.mxu0 0.0
    %404 = vmatpush2.msra.mxu0 0.0
    %405 = vmatprep.subr.mxu0 0.0
    %406 = vmatpush2.msra.mxu0 0.0
    %407 = vmatprep.subr.mxu0 0.0
    %408 = vmatpush2.msra.mxu0 0.0
    %409 = vmatprep.subr.mxu0 0.0
    %410 = vmatpush2.msra.mxu0 0.0
    %411 = vmatprep.subr.mxu0 0.0
    %412 = vmatpush2.msra.mxu0 0.0
    %413 = vmatprep.subr.mxu0 0.0
    %414 = vmatpush2.msra.mxu0 0.0
    %415 = vmatprep.subr.mxu0 0.0
    %416 = vmatpush2.msra.mxu0 0.0
    %417 = vmatprep.subr.mxu0 0.0
    %418 = vmatpush2.msra.mxu0 0.0
    %419 = vmatprep.subr.mxu0 0.0
    %420 = vmatpush2.msra.mxu0 0.0
    %421 = vmatprep.subr.mxu0 0.0
    %422 = vmatpush2.msra.mxu0 0.0
    %423 = vmatprep.subr.mxu0 0.0
    %424 = vmatpush2.msra.mxu0 0.0
    %425 = vmatprep.subr.mxu0 0.0
    %426 = vmatpush2.msra.mxu0 0.0
    %427 = vmatprep.subr.mxu0 0.0
    %428 = vmatpush2.msra.mxu0 0.0
    %429 = vmatprep.subr.mxu0 0.0
    %430 = vmatpush2.msra.mxu0 0.0
    %431 = vmatprep.subr.mxu0 0.0
    %432 = vmatpush2.msra.mxu0 0.0
    %433 = vmatprep.mubr.f32.mxu0 0.0
    %434 = vmatmul.mubr.f32.gmra.mxu0 %v367
    %v435 = vpop.f32.mrf.mxu0
    %v436 = vadd.f32 %v364, %v435
    %v437 = vpop.f32.mrf.mxu0
    %438 = vdwg.mxu0
    %v439 = vtanh.pop %v436
    %v441 = vsel %vm213, %v439, 0
    %443 = vmatprep.subr.mxu0 0.0
    %444 = vmatpush1.msra.mxu0 0.0
    %445 = vmatprep.subr.mxu0 0.0
    %446 = vmatpush1.msra.mxu0 0.0
    %447 = vmatprep.subr.mxu0 0.0
    %448 = vmatpush1.msra.mxu0 0.0
    %449 = vmatprep.subr.mxu0 0.0
    %450 = vmatpush1.msra.mxu0 0.0
    %451 = vmatprep.subr.mxu0 0.0
    %452 = vmatpush1.msra.mxu0 0.0
    %453 = vmatprep.subr.mxu0 0.0
    %454 = vmatpush1.msra.mxu0 0.0
    %455 = vmatprep.subr.mxu0 0.0
    %456 = vmatpush1.msra.mxu0 0.0
    %457 = vmatprep.subr.mxu0 0.0
    %458 = vmatpush1.msra.mxu0 0.0
    %459 = vmatprep.subr.mxu0 0.0
    %460 = vmatpush1.msra.mxu0 0.0
    %461 = vmatprep.subr.mxu0 0.0
    %462 = vmatpush1.msra.mxu0 0.0
    %463 = vmatprep.subr.mxu0 0.0
    %464 = vmatpush1.msra.mxu0 0.0
    %465 = vmatprep.subr.mxu0 0.0
    %466 = vmatpush1.msra.mxu0 0.0
    %467 = vmatprep.subr.mxu0 0.0
    %468 = vmatpush1.msra.mxu0 %v113
    %469 = vmatprep.subr.mxu0 0.0
    %470 = vmatpush1.msra.mxu0 %v112
    %471 = vmatprep.subr.mxu0 0.0
    %472 = vmatpush1.msra.mxu0 %v111
    %473 = vmatprep.subr.mxu0 0.0
    %474 = vmatpush1.msra.mxu0 %v110
    %475 = vmatprep.subr.mxu0 0.0
    %476 = vmatpush2.msra.mxu0 0.0
    %477 = vmatprep.subr.mxu0 0.0
    %478 = vmatpush2.msra.mxu0 0.0
    %479 = vmatprep.subr.mxu0 0.0
    %480 = vmatpush2.msra.mxu0 0.0
    %481 = vmatprep.subr.mxu0 0.0
    %482 = vmatpush2.msra.mxu0 0.0
    %483 = vmatprep.subr.mxu0 0.0
    %484 = vmatpush2.msra.mxu0 0.0
    %485 = vmatprep.subr.mxu0 0.0
    %486 = vmatpush2.msra.mxu0 0.0
    %487 = vmatprep.subr.mxu0 0.0
    %488 = vmatpush2.msra.mxu0 0.0
    %489 = vmatprep.subr.mxu0 0.0
    %490 = vmatpush2.msra.mxu0 0.0
    %491 = vmatprep.subr.mxu0 0.0
    %492 = vmatpush2.msra.mxu0 0.0
    %493 = vmatprep.subr.mxu0 0.0
    %494 = vmatpush2.msra.mxu0 0.0
    %495 = vmatprep.subr.mxu0 0.0
    %496 = vmatpush2.msra.mxu0 0.0
    %497 = vmatprep.subr.mxu0 0.0
    %498 = vmatpush2.msra.mxu0 0.0
    %499 = vmatprep.subr.mxu0 0.0
    %500 = vmatpush2.msra.mxu0 0.0
    %501 = vmatprep.subr.mxu0 0.0
    %502 = vmatpush2.msra.mxu0 0.0
    %503 = vmatprep.subr.mxu0 0.0
    %504 = vmatpush2.msra.mxu0 0.0
    %505 = vmatprep.subr.mxu0 0.0
    %506 = vmatpush2.msra.mxu0 0.0
    %507 = vmatprep.mubr.f32.mxu0 0.0
    %508 = vmatmul.mubr.f32.gmra.mxu0 %v441
    %v509 = vpop.f32.mrf.mxu0
    %v510 = vadd.f32 %v206, %v509
    %v511 = vpop.f32.mrf.mxu0
    %512 = vdwg.mxu0
    %v513 = vtanh.pop %v510
    %v515 = vrot.slane %v206, 2
    %v518 = vsel %vm213, %v513, 0
    %520 = vmatprep.subr.mxu0 0.0
    %521 = vmatpush1.msra.mxu0 0.0
    %522 = vmatprep.subr.mxu0 0.0
    %523 = vmatpush1.msra.mxu0 0.0
    %524 = vmatprep.subr.mxu0 0.0
    %525 = vmatpush1.msra.mxu0 0.0
    %526 = vmatprep.subr.mxu0 0.0
    %527 = vmatpush1.msra.mxu0 0.0
    %528 = vmatprep.subr.mxu0 0.0
    %529 = vmatpush1.msra.mxu0 0.0
    %530 = vmatprep.subr.mxu0 0.0
    %531 = vmatpush1.msra.mxu0 0.0
    %532 = vmatprep.subr.mxu0 0.0
    %533 = vmatpush1.msra.mxu0 0.0
    %534 = vmatprep.subr.mxu0 0.0
    %535 = vmatpush1.msra.mxu0 0.0
    %536 = vmatprep.subr.mxu0 0.0
    %537 = vmatpush1.msra.mxu0 0.0
    %538 = vmatprep.subr.mxu0 0.0
    %539 = vmatpush1.msra.mxu0 0.0
    %540 = vmatprep.subr.mxu0 0.0
    %541 = vmatpush1.msra.mxu0 0.0
    %542 = vmatprep.subr.mxu0 0.0
    %543 = vmatpush1.msra.mxu0 0.0
    %544 = vmatprep.subr.mxu0 0.0
    %545 = vmatpush1.msra.mxu0 %v113
    %546 = vmatprep.subr.mxu0 0.0
    %547 = vmatpush1.msra.mxu0 %v112
    %548 = vmatprep.subr.mxu0 0.0
    %549 = vmatpush1.msra.mxu0 %v111
    %550 = vmatprep.subr.mxu0 0.0
    %551 = vmatpush1.msra.mxu0 %v110
    %552 = vmatprep.subr.mxu0 0.0
    %553 = vmatpush2.msra.mxu0 0.0
    %554 = vmatprep.subr.mxu0 0.0
    %555 = vmatpush2.msra.mxu0 0.0
    %556 = vmatprep.subr.mxu0 0.0
    %557 = vmatpush2.msra.mxu0 0.0
    %558 = vmatprep.subr.mxu0 0.0
    %559 = vmatpush2.msra.mxu0 0.0
    %560 = vmatprep.subr.mxu0 0.0
    %561 = vmatpush2.msra.mxu0 0.0
    %562 = vmatprep.subr.mxu0 0.0
    %563 = vmatpush2.msra.mxu0 0.0
    %564 = vmatprep.subr.mxu0 0.0
    %565 = vmatpush2.msra.mxu0 0.0
    %566 = vmatprep.subr.mxu0 0.0
    %567 = vmatpush2.msra.mxu0 0.0
    %568 = vmatprep.subr.mxu0 0.0
    %569 = vmatpush2.msra.mxu0 0.0
    %570 = vmatprep.subr.mxu0 0.0
    %571 = vmatpush2.msra.mxu0 0.0
    %572 = vmatprep.subr.mxu0 0.0
    %573 = vmatpush2.msra.mxu0 0.0
    %574 = vmatprep.subr.mxu0 0.0
    %575 = vmatpush2.msra.mxu0 0.0
    %576 = vmatprep.subr.mxu0 0.0
    %577 = vmatpush2.msra.mxu0 0.0
    %578 = vmatprep.subr.mxu0 0.0
    %579 = vmatpush2.msra.mxu0 0.0
    %580 = vmatprep.subr.mxu0 0.0
    %581 = vmatpush2.msra.mxu0 0.0
    %582 = vmatprep.subr.mxu0 0.0
    %583 = vmatpush2.msra.mxu0 0.0
    %584 = vmatprep.mubr.f32.mxu0 0.0
    %585 = vmatmul.mubr.f32.gmra.mxu0 %v518
    %v586 = vpop.f32.mrf.mxu0
    %v587 = vadd.f32 %v515, %v586
    %v588 = vpop.f32.mrf.mxu0
    %589 = vdwg.mxu0
    %v590 = vtanh.pop %v587
    %v591 = vrot.slane %v206, 4
    %v594 = vsel %vm213, %v590, 0
    %596 = vmatprep.subr.mxu0 0.0
    %597 = vmatpush1.msra.mxu0 0.0
    %598 = vmatprep.subr.mxu0 0.0
    %599 = vmatpush1.msra.mxu0 0.0
    %600 = vmatprep.subr.mxu0 0.0
    %601 = vmatpush1.msra.mxu0 0.0
    %602 = vmatprep.subr.mxu0 0.0
    %603 = vmatpush1.msra.mxu0 0.0
    %604 = vmatprep.subr.mxu0 0.0
    %605 = vmatpush1.msra.mxu0 0.0
    %606 = vmatprep.subr.mxu0 0.0
    %607 = vmatpush1.msra.mxu0 0.0
    %608 = vmatprep.subr.mxu0 0.0
    %609 = vmatpush1.msra.mxu0 0.0
    %610 = vmatprep.subr.mxu0 0.0
    %611 = vmatpush1.msra.mxu0 0.0
    %612 = vmatprep.subr.mxu0 0.0
    %613 = vmatpush1.msra.mxu0 0.0
    %614 = vmatprep.subr.mxu0 0.0
    %615 = vmatpush1.msra.mxu0 0.0
    %616 = vmatprep.subr.mxu0 0.0
    %617 = vmatpush1.msra.mxu0 0.0
    %618 = vmatprep.subr.mxu0 0.0
    %619 = vmatpush1.msra.mxu0 0.0
    %620 = vmatprep.subr.mxu0 0.0
    %621 = vmatpush1.msra.mxu0 %v113
    %622 = vmatprep.subr.mxu0 0.0
    %623 = vmatpush1.msra.mxu0 %v112
    %624 = vmatprep.subr.mxu0 0.0
    %625 = vmatpush1.msra.mxu0 %v111
    %626 = vmatprep.subr.mxu0 0.0
    %627 = vmatpush1.msra.mxu0 %v110
    %628 = vmatprep.subr.mxu0 0.0
    %629 = vmatpush2.msra.mxu0 0.0
    %630 = vmatprep.subr.mxu0 0.0
    %631 = vmatpush2.msra.mxu0 0.0
    %632 = vmatprep.subr.mxu0 0.0
    %633 = vmatpush2.msra.mxu0 0.0
    %634 = vmatprep.subr.mxu0 0.0
    %635 = vmatpush2.msra.mxu0 0.0
    %636 = vmatprep.subr.mxu0 0.0
    %637 = vmatpush2.msra.mxu0 0.0
    %638 = vmatprep.subr.mxu0 0.0
    %639 = vmatpush2.msra.mxu0 0.0
    %640 = vmatprep.subr.mxu0 0.0
    %641 = vmatpush2.msra.mxu0 0.0
    %642 = vmatprep.subr.mxu0 0.0
    %643 = vmatpush2.msra.mxu0 0.0
    %644 = vmatprep.subr.mxu0 0.0
    %645 = vmatpush2.msra.mxu0 0.0
    %646 = vmatprep.subr.mxu0 0.0
    %647 = vmatpush2.msra.mxu0 0.0
    %648 = vmatprep.subr.mxu0 0.0
    %649 = vmatpush2.msra.mxu0 0.0
    %650 = vmatprep.subr.mxu0 0.0
    %651 = vmatpush2.msra.mxu0 0.0
    %652 = vmatprep.subr.mxu0 0.0
    %653 = vmatpush2.msra.mxu0 0.0
    %654 = vmatprep.subr.mxu0 0.0
    %655 = vmatpush2.msra.mxu0 0.0
    %656 = vmatprep.subr.mxu0 0.0
    %657 = vmatpush2.msra.mxu0 0.0
    %658 = vmatprep.subr.mxu0 0.0
    %659 = vmatpush2.msra.mxu0 0.0
    %660 = vmatprep.mubr.f32.mxu0 0.0
    %661 = vmatmul.mubr.f32.gmra.mxu0 %v594
    %v662 = vpop.f32.mrf.mxu0
    %v663 = vadd.f32 %v591, %v662
    %v664 = vpop.f32.mrf.mxu0
    %665 = vdwg.mxu0
    %v666 = vtanh.pop %v663
    %v667 = vrot.slane %v206, 6
    %v670 = vsel %vm213, %v666, 0
    %672 = vmatprep.subr.mxu0 0.0
    %673 = vmatpush1.msra.mxu0 0.0
    %674 = vmatprep.subr.mxu0 0.0
    %675 = vmatpush1.msra.mxu0 0.0
    %676 = vmatprep.subr.mxu0 0.0
    %677 = vmatpush1.msra.mxu0 0.0
    %678 = vmatprep.subr.mxu0 0.0
    %679 = vmatpush1.msra.mxu0 0.0
    %680 = vmatprep.subr.mxu0 0.0
    %681 = vmatpush1.msra.mxu0 0.0
    %682 = vmatprep.subr.mxu0 0.0
    %683 = vmatpush1.msra.mxu0 0.0
    %684 = vmatprep.subr.mxu0 0.0
    %685 = vmatpush1.msra.mxu0 0.0
    %686 = vmatprep.subr.mxu0 0.0
    %687 = vmatpush1.msra.mxu0 0.0
    %688 = vmatprep.subr.mxu0 0.0
    %689 = vmatpush1.msra.mxu0 0.0
    %690 = vmatprep.subr.mxu0 0.0
    %691 = vmatpush1.msra.mxu0 0.0
    %692 = vmatprep.subr.mxu0 0.0
    %693 = vmatpush1.msra.mxu0 0.0
    %694 = vmatprep.subr.mxu0 0.0
    %695 = vmatpush1.msra.mxu0 0.0
    %696 = vmatprep.subr.mxu0 0.0
    %697 = vmatpush1.msra.mxu0 %v113
    %698 = vmatprep.subr.mxu0 0.0
    %699 = vmatpush1.msra.mxu0 %v112
    %700 = vmatprep.subr.mxu0 0.0
    %701 = vmatpush1.msra.mxu0 %v111
    %702 = vmatprep.subr.mxu0 0.0
    %703 = vmatpush1.msra.mxu0 %v110
    %704 = vmatprep.subr.mxu0 0.0
    %705 = vmatpush2.msra.mxu0 0.0
    %706 = vmatprep.subr.mxu0 0.0
    %707 = vmatpush2.msra.mxu0 0.0
    %708 = vmatprep.subr.mxu0 0.0
    %709 = vmatpush2.msra.mxu0 0.0
    %710 = vmatprep.subr.mxu0 0.0
    %711 = vmatpush2.msra.mxu0 0.0
    %712 = vmatprep.subr.mxu0 0.0
    %713 = vmatpush2.msra.mxu0 0.0
    %714 = vmatprep.subr.mxu0 0.0
    %715 = vmatpush2.msra.mxu0 0.0
    %716 = vmatprep.subr.mxu0 0.0
    %717 = vmatpush2.msra.mxu0 0.0
    %718 = vmatprep.subr.mxu0 0.0
    %719 = vmatpush2.msra.mxu0 0.0
    %720 = vmatprep.subr.mxu0 0.0
    %721 = vmatpush2.msra.mxu0 0.0
    %722 = vmatprep.subr.mxu0 0.0
    %723 = vmatpush2.msra.mxu0 0.0
    %724 = vmatprep.subr.mxu0 0.0
    %725 = vmatpush2.msra.mxu0 0.0
    %726 = vmatprep.subr.mxu0 0.0
    %727 = vmatpush2.msra.mxu0 0.0
    %728 = vmatprep.subr.mxu0 0.0
    %729 = vmatpush2.msra.mxu0 0.0
    %730 = vmatprep.subr.mxu0 0.0
    %731 = vmatpush2.msra.mxu0 0.0
    %732 = vmatprep.subr.mxu0 0.0
    %733 = vmatpush2.msra.mxu0 0.0
    %734 = vmatprep.subr.mxu0 0.0
    %735 = vmatpush2.msra.mxu0 0.0
    %736 = vmatprep.mubr.f32.mxu0 0.0
    %737 = vmatmul.mubr.f32.gmra.mxu0 %v670
    %v738 = vpop.f32.mrf.mxu0
    %v739 = vadd.f32 %v667, %v738
    %v740 = vpop.f32.mrf.mxu0
    %741 = vdwg.mxu0
    %v742 = vtanh.pop %v739
    %v743 = vld [vmem:[#allocation8] sm:$0xff]
    %v744 = vld [vmem:[#allocation8 + $0x8] sm:$0xff]
    %v745 = vld [vmem:[#allocation8 + $0x10] sm:$0xff]
    %v746 = vld [vmem:[#allocation8 + $0x18] sm:$0xff]
    %v747 = vld [vmem:[#allocation10] sm:$0xff]
    %v748 = vld [vmem:[#allocation10 + $0x8] sm:$0xff]
    %v749 = vld [vmem:[#allocation10 + $0x10] sm:$0xff]
    %v750 = vld [vmem:[#allocation10 + $0x18] sm:$0xff]
    %v751 = vld [vmem:[#allocation11] sm:$0x1]
    %v753 = vlaneseq
    %v754 = vshrl.u32 %v753, 7
    %v755 = vsub.s32 0, %v754
    %v756 = vrot.slane %v751, %v755
    %758 = vmatprep.subr.mxu0 0.0
    %759 = vmatpush1.msra.mxu0 0.0
    %760 = vmatprep.subr.mxu0 0.0
    %761 = vmatpush1.msra.mxu0 0.0
    %762 = vmatprep.subr.mxu0 0.0
    %763 = vmatpush1.msra.mxu0 0.0
    %764 = vmatprep.subr.mxu0 0.0
    %765 = vmatpush1.msra.mxu0 0.0
    %766 = vmatprep.subr.mxu0 0.0
    %767 = vmatpush1.msra.mxu0 0.0
    %768 = vmatprep.subr.mxu0 0.0
    %769 = vmatpush1.msra.mxu0 0.0
    %770 = vmatprep.subr.mxu0 0.0
    %771 = vmatpush1.msra.mxu0 0.0
    %772 = vmatprep.subr.mxu0 0.0
    %773 = vmatpush1.msra.mxu0 0.0
    %774 = vmatprep.subr.mxu0 0.0
    %775 = vmatpush1.msra.mxu0 0.0
    %776 = vmatprep.subr.mxu0 0.0
    %777 = vmatpush1.msra.mxu0 0.0
    %778 = vmatprep.subr.mxu0 0.0
    %779 = vmatpush1.msra.mxu0 0.0
    %780 = vmatprep.subr.mxu0 0.0
    %781 = vmatpush1.msra.mxu0 0.0
    %782 = vmatprep.subr.mxu0 0.0
    %783 = vmatpush1.msra.mxu0 %v746
    %784 = vmatprep.subr.mxu0 0.0
    %785 = vmatpush1.msra.mxu0 %v745
    %786 = vmatprep.subr.mxu0 0.0
    %787 = vmatpush1.msra.mxu0 %v744
    %788 = vmatprep.subr.mxu0 0.0
    %789 = vmatpush1.msra.mxu0 %v743
    %790 = vmatprep.subr.mxu0 0.0
    %791 = vmatpush2.msra.mxu0 0.0
    %792 = vmatprep.subr.mxu0 0.0
    %793 = vmatpush2.msra.mxu0 0.0
    %794 = vmatprep.subr.mxu0 0.0
    %795 = vmatpush2.msra.mxu0 0.0
    %796 = vmatprep.subr.mxu0 0.0
    %797 = vmatpush2.msra.mxu0 0.0
    %798 = vmatprep.subr.mxu0 0.0
    %799 = vmatpush2.msra.mxu0 0.0
    %800 = vmatprep.subr.mxu0 0.0
    %801 = vmatpush2.msra.mxu0 0.0
    %802 = vmatprep.subr.mxu0 0.0
    %803 = vmatpush2.msra.mxu0 0.0
    %804 = vmatprep.subr.mxu0 0.0
    %805 = vmatpush2.msra.mxu0 0.0
    %806 = vmatprep.subr.mxu0 0.0
    %807 = vmatpush2.msra.mxu0 0.0
    %808 = vmatprep.subr.mxu0 0.0
    %809 = vmatpush2.msra.mxu0 0.0
    %810 = vmatprep.subr.mxu0 0.0
    %811 = vmatpush2.msra.mxu0 0.0
    %812 = vmatprep.subr.mxu0 0.0
    %813 = vmatpush2.msra.mxu0 0.0
    %814 = vmatprep.subr.mxu0 0.0
    %815 = vmatpush2.msra.mxu0 0.0
    %816 = vmatprep.subr.mxu0 0.0
    %817 = vmatpush2.msra.mxu0 0.0
    %818 = vmatprep.subr.mxu0 0.0
    %819 = vmatpush2.msra.mxu0 0.0
    %820 = vmatprep.subr.mxu0 0.0
    %821 = vmatpush2.msra.mxu0 0.0
    %822 = vmatprep.mubr.f32.mxu0 0.0
    %823 = vmatmul.mubr.f32.gmra.mxu0 %v215
    %v824 = vpop.f32.mrf.mxu0
    %v825 = vadd.f32 %v756, %v824
    %v826 = vpop.f32.mrf.mxu0
    %827 = vdwg.mxu0
    %828 = vmatprep.subr.mxu0 0.0
    %829 = vmatpush1.msra.mxu0 0.0
    %830 = vmatprep.subr.mxu0 0.0
    %831 = vmatpush1.msra.mxu0 0.0
    %832 = vmatprep.subr.mxu0 0.0
    %833 = vmatpush1.msra.mxu0 0.0
    %834 = vmatprep.subr.mxu0 0.0
    %835 = vmatpush1.msra.mxu0 0.0
    %836 = vmatprep.subr.mxu0 0.0
    %837 = vmatpush1.msra.mxu0 0.0
    %838 = vmatprep.subr.mxu0 0.0
    %839 = vmatpush1.msra.mxu0 0.0
    %840 = vmatprep.subr.mxu0 0.0
    %841 = vmatpush1.msra.mxu0 0.0
    %842 = vmatprep.subr.mxu0 0.0
    %843 = vmatpush1.msra.mxu0 0.0
    %844 = vmatprep.subr.mxu0 0.0
    %845 = vmatpush1.msra.mxu0 0.0
    %846 = vmatprep.subr.mxu0 0.0
    %847 = vmatpush1.msra.mxu0 0.0
    %848 = vmatprep.subr.mxu0 0.0
    %849 = vmatpush1.msra.mxu0 0.0
    %850 = vmatprep.subr.mxu0 0.0
    %851 = vmatpush1.msra.mxu0 0.0
    %852 = vmatprep.subr.mxu0 0.0
    %853 = vmatpush1.msra.mxu0 %v746
    %854 = vmatprep.subr.mxu0 0.0
    %855 = vmatpush1.msra.mxu0 %v745
    %856 = vmatprep.subr.mxu0 0.0
    %857 = vmatpush1.msra.mxu0 %v744
    %858 = vmatprep.subr.mxu0 0.0
    %859 = vmatpush1.msra.mxu0 %v743
    %860 = vmatprep.subr.mxu0 0.0
    %861 = vmatpush2.msra.mxu0 0.0
    %862 = vmatprep.subr.mxu0 0.0
    %863 = vmatpush2.msra.mxu0 0.0
    %864 = vmatprep.subr.mxu0 0.0
    %865 = vmatpush2.msra.mxu0 0.0
    %866 = vmatprep.subr.mxu0 0.0
    %867 = vmatpush2.msra.mxu0 0.0
    %868 = vmatprep.subr.mxu0 0.0
    %869 = vmatpush2.msra.mxu0 0.0
    %870 = vmatprep.subr.mxu0 0.0
    %871 = vmatpush2.msra.mxu0 0.0
    %872 = vmatprep.subr.mxu0 0.0
    %873 = vmatpush2.msra.mxu0 0.0
    %874 = vmatprep.subr.mxu0 0.0
    %875 = vmatpush2.msra.mxu0 0.0
    %876 = vmatprep.subr.mxu0 0.0
    %877 = vmatpush2.msra.mxu0 0.0
    %878 = vmatprep.subr.mxu0 0.0
    %879 = vmatpush2.msra.mxu0 0.0
    %880 = vmatprep.subr.mxu0 0.0
    %881 = vmatpush2.msra.mxu0 0.0
    %882 = vmatprep.subr.mxu0 0.0
    %883 = vmatpush2.msra.mxu0 0.0
    %884 = vmatprep.subr.mxu0 0.0
    %885 = vmatpush2.msra.mxu0 0.0
    %886 = vmatprep.subr.mxu0 0.0
    %887 = vmatpush2.msra.mxu0 0.0
    %888 = vmatprep.subr.mxu0 0.0
    %889 = vmatpush2.msra.mxu0 0.0
    %890 = vmatprep.subr.mxu0 0.0
    %891 = vmatpush2.msra.mxu0 0.0
    %892 = vmatprep.mubr.f32.mxu0 0.0
    %893 = vmatmul.mubr.f32.gmra.mxu0 %v291
    %v894 = vpop.f32.mrf.mxu0
    %v895 = vadd.f32 %v756, %v894
    %v896 = vpop.f32.mrf.mxu0
    %897 = vdwg.mxu0
    %898 = vmatprep.subr.mxu0 0.0
    %899 = vmatpush1.msra.mxu0 0.0
    %900 = vmatprep.subr.mxu0 0.0
    %901 = vmatpush1.msra.mxu0 0.0
    %902 = vmatprep.subr.mxu0 0.0
    %903 = vmatpush1.msra.mxu0 0.0
    %904 = vmatprep.subr.mxu0 0.0
    %905 = vmatpush1.msra.mxu0 0.0
    %906 = vmatprep.subr.mxu0 0.0
    %907 = vmatpush1.msra.mxu0 0.0
    %908 = vmatprep.subr.mxu0 0.0
    %909 = vmatpush1.msra.mxu0 0.0
    %910 = vmatprep.subr.mxu0 0.0
    %911 = vmatpush1.msra.mxu0 0.0
    %912 = vmatprep.subr.mxu0 0.0
    %913 = vmatpush1.msra.mxu0 0.0
    %914 = vmatprep.subr.mxu0 0.0
    %915 = vmatpush1.msra.mxu0 0.0
    %916 = vmatprep.subr.mxu0 0.0
    %917 = vmatpush1.msra.mxu0 0.0
    %918 = vmatprep.subr.mxu0 0.0
    %919 = vmatpush1.msra.mxu0 0.0
    %920 = vmatprep.subr.mxu0 0.0
    %921 = vmatpush1.msra.mxu0 0.0
    %922 = vmatprep.subr.mxu0 0.0
    %923 = vmatpush1.msra.mxu0 %v746
    %924 = vmatprep.subr.mxu0 0.0
    %925 = vmatpush1.msra.mxu0 %v745
    %926 = vmatprep.subr.mxu0 0.0
    %927 = vmatpush1.msra.mxu0 %v744
    %928 = vmatprep.subr.mxu0 0.0
    %929 = vmatpush1.msra.mxu0 %v743
    %930 = vmatprep.subr.mxu0 0.0
    %931 = vmatpush2.msra.mxu0 0.0
    %932 = vmatprep.subr.mxu0 0.0
    %933 = vmatpush2.msra.mxu0 0.0
    %934 = vmatprep.subr.mxu0 0.0
    %935 = vmatpush2.msra.mxu0 0.0
    %936 = vmatprep.subr.mxu0 0.0
    %937 = vmatpush2.msra.mxu0 0.0
    %938 = vmatprep.subr.mxu0 0.0
    %939 = vmatpush2.msra.mxu0 0.0
    %940 = vmatprep.subr.mxu0 0.0
    %941 = vmatpush2.msra.mxu0 0.0
    %942 = vmatprep.subr.mxu0 0.0
    %943 = vmatpush2.msra.mxu0 0.0
    %944 = vmatprep.subr.mxu0 0.0
    %945 = vmatpush2.msra.mxu0 0.0
    %946 = vmatprep.subr.mxu0 0.0
    %947 = vmatpush2.msra.mxu0 0.0
    %948 = vmatprep.subr.mxu0 0.0
    %949 = vmatpush2.msra.mxu0 0.0
    %950 = vmatprep.subr.mxu0 0.0
    %951 = vmatpush2.msra.mxu0 0.0
    %952 = vmatprep.subr.mxu0 0.0
    %953 = vmatpush2.msra.mxu0 0.0
    %954 = vmatprep.subr.mxu0 0.0
    %955 = vmatpush2.msra.mxu0 0.0
    %956 = vmatprep.subr.mxu0 0.0
    %957 = vmatpush2.msra.mxu0 0.0
    %958 = vmatprep.subr.mxu0 0.0
    %959 = vmatpush2.msra.mxu0 0.0
    %960 = vmatprep.subr.mxu0 0.0
    %961 = vmatpush2.msra.mxu0 0.0
    %962 = vmatprep.mubr.f32.mxu0 0.0
    %963 = vmatmul.mubr.f32.gmra.mxu0 %v367
    %v964 = vpop.f32.mrf.mxu0
    %v965 = vadd.f32 %v756, %v964
    %v966 = vpop.f32.mrf.mxu0
    %967 = vdwg.mxu0
    %968 = vmatprep.subr.mxu0 0.0
    %969 = vmatpush1.msra.mxu0 0.0
    %970 = vmatprep.subr.mxu0 0.0
    %971 = vmatpush1.msra.mxu0 0.0
    %972 = vmatprep.subr.mxu0 0.0
    %973 = vmatpush1.msra.mxu0 0.0
    %974 = vmatprep.subr.mxu0 0.0
    %975 = vmatpush1.msra.mxu0 0.0
    %976 = vmatprep.subr.mxu0 0.0
    %977 = vmatpush1.msra.mxu0 0.0
    %978 = vmatprep.subr.mxu0 0.0
    %979 = vmatpush1.msra.mxu0 0.0
    %980 = vmatprep.subr.mxu0 0.0
    %981 = vmatpush1.msra.mxu0 0.0
    %982 = vmatprep.subr.mxu0 0.0
    %983 = vmatpush1.msra.mxu0 0.0
    %984 = vmatprep.subr.mxu0 0.0
    %985 = vmatpush1.msra.mxu0 0.0
    %986 = vmatprep.subr.mxu0 0.0
    %987 = vmatpush1.msra.mxu0 0.0
    %988 = vmatprep.subr.mxu0 0.0
    %989 = vmatpush1.msra.mxu0 0.0
    %990 = vmatprep.subr.mxu0 0.0
    %991 = vmatpush1.msra.mxu0 0.0
    %992 = vmatprep.subr.mxu0 0.0
    %993 = vmatpush1.msra.mxu0 %v746
    %994 = vmatprep.subr.mxu0 0.0
    %995 = vmatpush1.msra.mxu0 %v745
    %996 = vmatprep.subr.mxu0 0.0
    %997 = vmatpush1.msra.mxu0 %v744
    %998 = vmatprep.subr.mxu0 0.0
    %999 = vmatpush1.msra.mxu0 %v743
    %1000 = vmatprep.subr.mxu0 0.0
    %1001 = vmatpush2.msra.mxu0 0.0
    %1002 = vmatprep.subr.mxu0 0.0
    %1003 = vmatpush2.msra.mxu0 0.0
    %1004 = vmatprep.subr.mxu0 0.0
    %1005 = vmatpush2.msra.mxu0 0.0
    %1006 = vmatprep.subr.mxu0 0.0
    %1007 = vmatpush2.msra.mxu0 0.0
    %1008 = vmatprep.subr.mxu0 0.0
    %1009 = vmatpush2.msra.mxu0 0.0
    %1010 = vmatprep.subr.mxu0 0.0
    %1011 = vmatpush2.msra.mxu0 0.0
    %1012 = vmatprep.subr.mxu0 0.0
    %1013 = vmatpush2.msra.mxu0 0.0
    %1014 = vmatprep.subr.mxu0 0.0
    %1015 = vmatpush2.msra.mxu0 0.0
    %1016 = vmatprep.subr.mxu0 0.0
    %1017 = vmatpush2.msra.mxu0 0.0
    %1018 = vmatprep.subr.mxu0 0.0
    %1019 = vmatpush2.msra.mxu0 0.0
    %1020 = vmatprep.subr.mxu0 0.0
    %1021 = vmatpush2.msra.mxu0 0.0
    %1022 = vmatprep.subr.mxu0 0.0
    %1023 = vmatpush2.msra.mxu0 0.0
    %1024 = vmatprep.subr.mxu0 0.0
    %1025 = vmatpush2.msra.mxu0 0.0
    %1026 = vmatprep.subr.mxu0 0.0
    %1027 = vmatpush2.msra.mxu0 0.0
    %1028 = vmatprep.subr.mxu0 0.0
    %1029 = vmatpush2.msra.mxu0 0.0
    %1030 = vmatprep.subr.mxu0 0.0
    %1031 = vmatpush2.msra.mxu0 0.0
    %1032 = vmatprep.mubr.f32.mxu0 0.0
    %1033 = vmatmul.mubr.f32.gmra.mxu0 %v441
    %v1034 = vpop.f32.mrf.mxu0
    %v1035 = vadd.f32 %v756, %v1034
    %v1036 = vpop.f32.mrf.mxu0
    %1037 = vdwg.mxu0
    %1038 = vmatprep.subr.mxu0 0.0
    %1039 = vmatpush1.msra.mxu0 0.0
    %1040 = vmatprep.subr.mxu0 0.0
    %1041 = vmatpush1.msra.mxu0 0.0
    %1042 = vmatprep.subr.mxu0 0.0
    %1043 = vmatpush1.msra.mxu0 0.0
    %1044 = vmatprep.subr.mxu0 0.0
    %1045 = vmatpush1.msra.mxu0 0.0
    %1046 = vmatprep.subr.mxu0 0.0
    %1047 = vmatpush1.msra.mxu0 0.0
    %1048 = vmatprep.subr.mxu0 0.0
    %1049 = vmatpush1.msra.mxu0 0.0
    %1050 = vmatprep.subr.mxu0 0.0
    %1051 = vmatpush1.msra.mxu0 0.0
    %1052 = vmatprep.subr.mxu0 0.0
    %1053 = vmatpush1.msra.mxu0 0.0
    %1054 = vmatprep.subr.mxu0 0.0
    %1055 = vmatpush1.msra.mxu0 0.0
    %1056 = vmatprep.subr.mxu0 0.0
    %1057 = vmatpush1.msra.mxu0 0.0
    %1058 = vmatprep.subr.mxu0 0.0
    %1059 = vmatpush1.msra.mxu0 0.0
    %1060 = vmatprep.subr.mxu0 0.0
    %1061 = vmatpush1.msra.mxu0 0.0
    %1062 = vmatprep.subr.mxu0 0.0
    %1063 = vmatpush1.msra.mxu0 %v746
    %1064 = vmatprep.subr.mxu0 0.0
    %1065 = vmatpush1.msra.mxu0 %v745
    %1066 = vmatprep.subr.mxu0 0.0
    %1067 = vmatpush1.msra.mxu0 %v744
    %1068 = vmatprep.subr.mxu0 0.0
    %1069 = vmatpush1.msra.mxu0 %v743
    %1070 = vmatprep.subr.mxu0 0.0
    %1071 = vmatpush2.msra.mxu0 0.0
    %1072 = vmatprep.subr.mxu0 0.0
    %1073 = vmatpush2.msra.mxu0 0.0
    %1074 = vmatprep.subr.mxu0 0.0
    %1075 = vmatpush2.msra.mxu0 0.0
    %1076 = vmatprep.subr.mxu0 0.0
    %1077 = vmatpush2.msra.mxu0 0.0
    %1078 = vmatprep.subr.mxu0 0.0
    %1079 = vmatpush2.msra.mxu0 0.0
    %1080 = vmatprep.subr.mxu0 0.0
    %1081 = vmatpush2.msra.mxu0 0.0
    %1082 = vmatprep.subr.mxu0 0.0
    %1083 = vmatpush2.msra.mxu0 0.0
    %1084 = vmatprep.subr.mxu0 0.0
    %1085 = vmatpush2.msra.mxu0 0.0
    %1086 = vmatprep.subr.mxu0 0.0
    %1087 = vmatpush2.msra.mxu0 0.0
    %1088 = vmatprep.subr.mxu0 0.0
    %1089 = vmatpush2.msra.mxu0 0.0
    %1090 = vmatprep.subr.mxu0 0.0
    %1091 = vmatpush2.msra.mxu0 0.0
    %1092 = vmatprep.subr.mxu0 0.0
    %1093 = vmatpush2.msra.mxu0 0.0
    %1094 = vmatprep.subr.mxu0 0.0
    %1095 = vmatpush2.msra.mxu0 0.0
    %1096 = vmatprep.subr.mxu0 0.0
    %1097 = vmatpush2.msra.mxu0 0.0
    %1098 = vmatprep.subr.mxu0 0.0
    %1099 = vmatpush2.msra.mxu0 0.0
    %1100 = vmatprep.subr.mxu0 0.0
    %1101 = vmatpush2.msra.mxu0 0.0
    %1102 = vmatprep.mubr.f32.mxu0 0.0
    %1103 = vmatmul.mubr.f32.gmra.mxu0 %v518
    %v1104 = vpop.f32.mrf.mxu0
    %v1105 = vadd.f32 %v756, %v1104
    %v1106 = vpop.f32.mrf.mxu0
    %1107 = vdwg.mxu0
    %1108 = vmatprep.subr.mxu0 0.0
    %1109 = vmatpush1.msra.mxu0 0.0
    %1110 = vmatprep.subr.mxu0 0.0
    %1111 = vmatpush1.msra.mxu0 0.0
    %1112 = vmatprep.subr.mxu0 0.0
    %1113 = vmatpush1.msra.mxu0 0.0
    %1114 = vmatprep.subr.mxu0 0.0
    %1115 = vmatpush1.msra.mxu0 0.0
    %1116 = vmatprep.subr.mxu0 0.0
    %1117 = vmatpush1.msra.mxu0 0.0
    %1118 = vmatprep.subr.mxu0 0.0
    %1119 = vmatpush1.msra.mxu0 0.0
    %1120 = vmatprep.subr.mxu0 0.0
    %1121 = vmatpush1.msra.mxu0 0.0
    %1122 = vmatprep.subr.mxu0 0.0
    %1123 = vmatpush1.msra.mxu0 0.0
    %1124 = vmatprep.subr.mxu0 0.0
    %1125 = vmatpush1.msra.mxu0 0.0
    %1126 = vmatprep.subr.mxu0 0.0
    %1127 = vmatpush1.msra.mxu0 0.0
    %1128 = vmatprep.subr.mxu0 0.0
    %1129 = vmatpush1.msra.mxu0 0.0
    %1130 = vmatprep.subr.mxu0 0.0
    %1131 = vmatpush1.msra.mxu0 0.0
    %1132 = vmatprep.subr.mxu0 0.0
    %1133 = vmatpush1.msra.mxu0 %v746
    %1134 = vmatprep.subr.mxu0 0.0
    %1135 = vmatpush1.msra.mxu0 %v745
    %1136 = vmatprep.subr.mxu0 0.0
    %1137 = vmatpush1.msra.mxu0 %v744
    %1138 = vmatprep.subr.mxu0 0.0
    %1139 = vmatpush1.msra.mxu0 %v743
    %1140 = vmatprep.subr.mxu0 0.0
    %1141 = vmatpush2.msra.mxu0 0.0
    %1142 = vmatprep.subr.mxu0 0.0
    %1143 = vmatpush2.msra.mxu0 0.0
    %1144 = vmatprep.subr.mxu0 0.0
    %1145 = vmatpush2.msra.mxu0 0.0
    %1146 = vmatprep.subr.mxu0 0.0
    %1147 = vmatpush2.msra.mxu0 0.0
    %1148 = vmatprep.subr.mxu0 0.0
    %1149 = vmatpush2.msra.mxu0 0.0
    %1150 = vmatprep.subr.mxu0 0.0
    %1151 = vmatpush2.msra.mxu0 0.0
    %1152 = vmatprep.subr.mxu0 0.0
    %1153 = vmatpush2.msra.mxu0 0.0
    %1154 = vmatprep.subr.mxu0 0.0
    %1155 = vmatpush2.msra.mxu0 0.0
    %1156 = vmatprep.subr.mxu0 0.0
    %1157 = vmatpush2.msra.mxu0 0.0
    %1158 = vmatprep.subr.mxu0 0.0
    %1159 = vmatpush2.msra.mxu0 0.0
    %1160 = vmatprep.subr.mxu0 0.0
    %1161 = vmatpush2.msra.mxu0 0.0
    %1162 = vmatprep.subr.mxu0 0.0
    %1163 = vmatpush2.msra.mxu0 0.0
    %1164 = vmatprep.subr.mxu0 0.0
    %1165 = vmatpush2.msra.mxu0 0.0
    %1166 = vmatprep.subr.mxu0 0.0
    %1167 = vmatpush2.msra.mxu0 0.0
    %1168 = vmatprep.subr.mxu0 0.0
    %1169 = vmatpush2.msra.mxu0 0.0
    %1170 = vmatprep.subr.mxu0 0.0
    %1171 = vmatpush2.msra.mxu0 0.0
    %1172 = vmatprep.mubr.f32.mxu0 0.0
    %1173 = vmatmul.mubr.f32.gmra.mxu0 %v594
    %v1174 = vpop.f32.mrf.mxu0
    %v1175 = vadd.f32 %v756, %v1174
    %v1176 = vpop.f32.mrf.mxu0
    %1177 = vdwg.mxu0
    %1178 = vmatprep.subr.mxu0 0.0
    %1179 = vmatpush1.msra.mxu0 0.0
    %1180 = vmatprep.subr.mxu0 0.0
    %1181 = vmatpush1.msra.mxu0 0.0
    %1182 = vmatprep.subr.mxu0 0.0
    %1183 = vmatpush1.msra.mxu0 0.0
    %1184 = vmatprep.subr.mxu0 0.0
    %1185 = vmatpush1.msra.mxu0 0.0
    %1186 = vmatprep.subr.mxu0 0.0
    %1187 = vmatpush1.msra.mxu0 0.0
    %1188 = vmatprep.subr.mxu0 0.0
    %1189 = vmatpush1.msra.mxu0 0.0
    %1190 = vmatprep.subr.mxu0 0.0
    %1191 = vmatpush1.msra.mxu0 0.0
    %1192 = vmatprep.subr.mxu0 0.0
    %1193 = vmatpush1.msra.mxu0 0.0
    %1194 = vmatprep.subr.mxu0 0.0
    %1195 = vmatpush1.msra.mxu0 0.0
    %1196 = vmatprep.subr.mxu0 0.0
    %1197 = vmatpush1.msra.mxu0 0.0
    %1198 = vmatprep.subr.mxu0 0.0
    %1199 = vmatpush1.msra.mxu0 0.0
    %1200 = vmatprep.subr.mxu0 0.0
    %1201 = vmatpush1.msra.mxu0 0.0
    %1202 = vmatprep.subr.mxu0 0.0
    %1203 = vmatpush1.msra.mxu0 %v746
    %1204 = vmatprep.subr.mxu0 0.0
    %1205 = vmatpush1.msra.mxu0 %v745
    %1206 = vmatprep.subr.mxu0 0.0
    %1207 = vmatpush1.msra.mxu0 %v744
    %1208 = vmatprep.subr.mxu0 0.0
    %1209 = vmatpush1.msra.mxu0 %v743
    %1210 = vmatprep.subr.mxu0 0.0
    %1211 = vmatpush2.msra.mxu0 0.0
    %1212 = vmatprep.subr.mxu0 0.0
    %1213 = vmatpush2.msra.mxu0 0.0
    %1214 = vmatprep.subr.mxu0 0.0
    %1215 = vmatpush2.msra.mxu0 0.0
    %1216 = vmatprep.subr.mxu0 0.0
    %1217 = vmatpush2.msra.mxu0 0.0
    %1218 = vmatprep.subr.mxu0 0.0
    %1219 = vmatpush2.msra.mxu0 0.0
    %1220 = vmatprep.subr.mxu0 0.0
    %1221 = vmatpush2.msra.mxu0 0.0
    %1222 = vmatprep.subr.mxu0 0.0
    %1223 = vmatpush2.msra.mxu0 0.0
    %1224 = vmatprep.subr.mxu0 0.0
    %1225 = vmatpush2.msra.mxu0 0.0
    %1226 = vmatprep.subr.mxu0 0.0
    %1227 = vmatpush2.msra.mxu0 0.0
    %1228 = vmatprep.subr.mxu0 0.0
    %1229 = vmatpush2.msra.mxu0 0.0
    %1230 = vmatprep.subr.mxu0 0.0
    %1231 = vmatpush2.msra.mxu0 0.0
    %1232 = vmatprep.subr.mxu0 0.0
    %1233 = vmatpush2.msra.mxu0 0.0
    %1234 = vmatprep.subr.mxu0 0.0
    %1235 = vmatpush2.msra.mxu0 0.0
    %1236 = vmatprep.subr.mxu0 0.0
    %1237 = vmatpush2.msra.mxu0 0.0
    %1238 = vmatprep.subr.mxu0 0.0
    %1239 = vmatpush2.msra.mxu0 0.0
    %1240 = vmatprep.subr.mxu0 0.0
    %1241 = vmatpush2.msra.mxu0 0.0
    %1242 = vmatprep.mubr.f32.mxu0 0.0
    %1243 = vmatmul.mubr.f32.gmra.mxu0 %v670
    %v1244 = vpop.f32.mrf.mxu0
    %v1245 = vadd.f32 %v756, %v1244
    %v1246 = vpop.f32.mrf.mxu0
    %1247 = vdwg.mxu0
    %v1249 = vsel %vm213, %v742, 0
    %1251 = vmatprep.subr.mxu0 0.0
    %1252 = vmatpush1.msra.mxu0 0.0
    %1253 = vmatprep.subr.mxu0 0.0
    %1254 = vmatpush1.msra.mxu0 0.0
    %1255 = vmatprep.subr.mxu0 0.0
    %1256 = vmatpush1.msra.mxu0 0.0
    %1257 = vmatprep.subr.mxu0 0.0
    %1258 = vmatpush1.msra.mxu0 0.0
    %1259 = vmatprep.subr.mxu0 0.0
    %1260 = vmatpush1.msra.mxu0 0.0
    %1261 = vmatprep.subr.mxu0 0.0
    %1262 = vmatpush1.msra.mxu0 0.0
    %1263 = vmatprep.subr.mxu0 0.0
    %1264 = vmatpush1.msra.mxu0 0.0
    %1265 = vmatprep.subr.mxu0 0.0
    %1266 = vmatpush1.msra.mxu0 0.0
    %1267 = vmatprep.subr.mxu0 0.0
    %1268 = vmatpush1.msra.mxu0 0.0
    %1269 = vmatprep.subr.mxu0 0.0
    %1270 = vmatpush1.msra.mxu0 0.0
    %1271 = vmatprep.subr.mxu0 0.0
    %1272 = vmatpush1.msra.mxu0 0.0
    %1273 = vmatprep.subr.mxu0 0.0
    %1274 = vmatpush1.msra.mxu0 0.0
    %1275 = vmatprep.subr.mxu0 0.0
    %1276 = vmatpush1.msra.mxu0 %v746
    %1277 = vmatprep.subr.mxu0 0.0
    %1278 = vmatpush1.msra.mxu0 %v745
    %1279 = vmatprep.subr.mxu0 0.0
    %1280 = vmatpush1.msra.mxu0 %v744
    %1281 = vmatprep.subr.mxu0 0.0
    %1282 = vmatpush1.msra.mxu0 %v743
    %1283 = vmatprep.subr.mxu0 0.0
    %1284 = vmatpush2.msra.mxu0 0.0
    %1285 = vmatprep.subr.mxu0 0.0
    %1286 = vmatpush2.msra.mxu0 0.0
    %1287 = vmatprep.subr.mxu0 0.0
    %1288 = vmatpush2.msra.mxu0 0.0
    %1289 = vmatprep.subr.mxu0 0.0
    %1290 = vmatpush2.msra.mxu0 0.0
    %1291 = vmatprep.subr.mxu0 0.0
    %1292 = vmatpush2.msra.mxu0 0.0
    %1293 = vmatprep.subr.mxu0 0.0
    %1294 = vmatpush2.msra.mxu0 0.0
    %1295 = vmatprep.subr.mxu0 0.0
    %1296 = vmatpush2.msra.mxu0 0.0
    %1297 = vmatprep.subr.mxu0 0.0
    %1298 = vmatpush2.msra.mxu0 0.0
    %1299 = vmatprep.subr.mxu0 0.0
    %1300 = vmatpush2.msra.mxu0 0.0
    %1301 = vmatprep.subr.mxu0 0.0
    %1302 = vmatpush2.msra.mxu0 0.0
    %1303 = vmatprep.subr.mxu0 0.0
    %1304 = vmatpush2.msra.mxu0 0.0
    %1305 = vmatprep.subr.mxu0 0.0
    %1306 = vmatpush2.msra.mxu0 0.0
    %1307 = vmatprep.subr.mxu0 0.0
    %1308 = vmatpush2.msra.mxu0 0.0
    %1309 = vmatprep.subr.mxu0 0.0
    %1310 = vmatpush2.msra.mxu0 0.0
    %1311 = vmatprep.subr.mxu0 0.0
    %1312 = vmatpush2.msra.mxu0 0.0
    %1313 = vmatprep.subr.mxu0 0.0
    %1314 = vmatpush2.msra.mxu0 0.0
    %1315 = vmatprep.mubr.f32.mxu0 0.0
    %1316 = vmatmul.mubr.f32.gmra.mxu0 %v1249
    %v1317 = vpop.f32.mrf.mxu0
    %v1318 = vadd.f32 %v756, %v1317
    %v1319 = vpop.f32.mrf.mxu0
    %1320 = vdwg.mxu0
    %v1321 = vtanh.pop %v825
    %v1323 = vsel %vm213, %v1321, 0
    %1325 = vmatprep.subr.mxu0 0.0
    %1326 = vmatpush1.msra.mxu0 0.0
    %1327 = vmatprep.subr.mxu0 0.0
    %1328 = vmatpush1.msra.mxu0 0.0
    %1329 = vmatprep.subr.mxu0 0.0
    %1330 = vmatpush1.msra.mxu0 0.0
    %1331 = vmatprep.subr.mxu0 0.0
    %1332 = vmatpush1.msra.mxu0 0.0
    %1333 = vmatprep.subr.mxu0 0.0
    %1334 = vmatpush1.msra.mxu0 0.0
    %1335 = vmatprep.subr.mxu0 0.0
    %1336 = vmatpush1.msra.mxu0 0.0
    %1337 = vmatprep.subr.mxu0 0.0
    %1338 = vmatpush1.msra.mxu0 0.0
    %1339 = vmatprep.subr.mxu0 0.0
    %1340 = vmatpush1.msra.mxu0 0.0
    %1341 = vmatprep.subr.mxu0 0.0
    %1342 = vmatpush1.msra.mxu0 0.0
    %1343 = vmatprep.subr.mxu0 0.0
    %1344 = vmatpush1.msra.mxu0 0.0
    %1345 = vmatprep.subr.mxu0 0.0
    %1346 = vmatpush1.msra.mxu0 0.0
    %1347 = vmatprep.subr.mxu0 0.0
    %1348 = vmatpush1.msra.mxu0 0.0
    %1349 = vmatprep.subr.mxu0 0.0
    %1350 = vmatpush1.msra.mxu0 %v750
    %1351 = vmatprep.subr.mxu0 0.0
    %1352 = vmatpush1.msra.mxu0 %v749
    %1353 = vmatprep.subr.mxu0 0.0
    %1354 = vmatpush1.msra.mxu0 %v748
    %1355 = vmatprep.subr.mxu0 0.0
    %1356 = vmatpush1.msra.mxu0 %v747
    %1357 = vmatprep.subr.mxu0 0.0
    %1358 = vmatpush2.msra.mxu0 0.0
    %1359 = vmatprep.subr.mxu0 0.0
    %1360 = vmatpush2.msra.mxu0 0.0
    %1361 = vmatprep.subr.mxu0 0.0
    %1362 = vmatpush2.msra.mxu0 0.0
    %1363 = vmatprep.subr.mxu0 0.0
    %1364 = vmatpush2.msra.mxu0 0.0
    %1365 = vmatprep.subr.mxu0 0.0
    %1366 = vmatpush2.msra.mxu0 0.0
    %1367 = vmatprep.subr.mxu0 0.0
    %1368 = vmatpush2.msra.mxu0 0.0
    %1369 = vmatprep.subr.mxu0 0.0
    %1370 = vmatpush2.msra.mxu0 0.0
    %1371 = vmatprep.subr.mxu0 0.0
    %1372 = vmatpush2.msra.mxu0 0.0
    %1373 = vmatprep.subr.mxu0 0.0
    %1374 = vmatpush2.msra.mxu0 0.0
    %1375 = vmatprep.subr.mxu0 0.0
    %1376 = vmatpush2.msra.mxu0 0.0
    %1377 = vmatprep.subr.mxu0 0.0
    %1378 = vmatpush2.msra.mxu0 0.0
    %1379 = vmatprep.subr.mxu0 0.0
    %1380 = vmatpush2.msra.mxu0 0.0
    %1381 = vmatprep.subr.mxu0 0.0
    %1382 = vmatpush2.msra.mxu0 0.0
    %1383 = vmatprep.subr.mxu0 0.0
    %1384 = vmatpush2.msra.mxu0 0.0
    %1385 = vmatprep.subr.mxu0 0.0
    %1386 = vmatpush2.msra.mxu0 0.0
    %1387 = vmatprep.subr.mxu0 0.0
    %1388 = vmatpush2.msra.mxu0 0.0
    %1389 = vmatprep.mubr.f32.mxu0 0.0
    %1390 = vmatmul.mubr.f32.gmra.mxu0 %v1323
    %v1391 = vpop.f32.mrf.mxu0
    %v1392 = vadd.f32 %v895, %v1391
    %v1393 = vpop.f32.mrf.mxu0
    %1394 = vdwg.mxu0
    %v1395 = vtanh.pop %v1392
    %v1397 = vsel %vm213, %v1395, 0
    %1399 = vmatprep.subr.mxu0 0.0
    %1400 = vmatpush1.msra.mxu0 0.0
    %1401 = vmatprep.subr.mxu0 0.0
    %1402 = vmatpush1.msra.mxu0 0.0
    %1403 = vmatprep.subr.mxu0 0.0
    %1404 = vmatpush1.msra.mxu0 0.0
    %1405 = vmatprep.subr.mxu0 0.0
    %1406 = vmatpush1.msra.mxu0 0.0
    %1407 = vmatprep.subr.mxu0 0.0
    %1408 = vmatpush1.msra.mxu0 0.0
    %1409 = vmatprep.subr.mxu0 0.0
    %1410 = vmatpush1.msra.mxu0 0.0
    %1411 = vmatprep.subr.mxu0 0.0
    %1412 = vmatpush1.msra.mxu0 0.0
    %1413 = vmatprep.subr.mxu0 0.0
    %1414 = vmatpush1.msra.mxu0 0.0
    %1415 = vmatprep.subr.mxu0 0.0
    %1416 = vmatpush1.msra.mxu0 0.0
    %1417 = vmatprep.subr.mxu0 0.0
    %1418 = vmatpush1.msra.mxu0 0.0
    %1419 = vmatprep.subr.mxu0 0.0
    %1420 = vmatpush1.msra.mxu0 0.0
    %1421 = vmatprep.subr.mxu0 0.0
    %1422 = vmatpush1.msra.mxu0 0.0
    %1423 = vmatprep.subr.mxu0 0.0
    %1424 = vmatpush1.msra.mxu0 %v750
    %1425 = vmatprep.subr.mxu0 0.0
    %1426 = vmatpush1.msra.mxu0 %v749
    %1427 = vmatprep.subr.mxu0 0.0
    %1428 = vmatpush1.msra.mxu0 %v748
    %1429 = vmatprep.subr.mxu0 0.0
    %1430 = vmatpush1.msra.mxu0 %v747
    %1431 = vmatprep.subr.mxu0 0.0
    %1432 = vmatpush2.msra.mxu0 0.0
    %1433 = vmatprep.subr.mxu0 0.0
    %1434 = vmatpush2.msra.mxu0 0.0
    %1435 = vmatprep.subr.mxu0 0.0
    %1436 = vmatpush2.msra.mxu0 0.0
    %1437 = vmatprep.subr.mxu0 0.0
    %1438 = vmatpush2.msra.mxu0 0.0
    %1439 = vmatprep.subr.mxu0 0.0
    %1440 = vmatpush2.msra.mxu0 0.0
    %1441 = vmatprep.subr.mxu0 0.0
    %1442 = vmatpush2.msra.mxu0 0.0
    %1443 = vmatprep.subr.mxu0 0.0
    %1444 = vmatpush2.msra.mxu0 0.0
    %1445 = vmatprep.subr.mxu0 0.0
    %1446 = vmatpush2.msra.mxu0 0.0
    %1447 = vmatprep.subr.mxu0 0.0
    %1448 = vmatpush2.msra.mxu0 0.0
    %1449 = vmatprep.subr.mxu0 0.0
    %1450 = vmatpush2.msra.mxu0 0.0
    %1451 = vmatprep.subr.mxu0 0.0
    %1452 = vmatpush2.msra.mxu0 0.0
    %1453 = vmatprep.subr.mxu0 0.0
    %1454 = vmatpush2.msra.mxu0 0.0
    %1455 = vmatprep.subr.mxu0 0.0
    %1456 = vmatpush2.msra.mxu0 0.0
    %1457 = vmatprep.subr.mxu0 0.0
    %1458 = vmatpush2.msra.mxu0 0.0
    %1459 = vmatprep.subr.mxu0 0.0
    %1460 = vmatpush2.msra.mxu0 0.0
    %1461 = vmatprep.subr.mxu0 0.0
    %1462 = vmatpush2.msra.mxu0 0.0
    %1463 = vmatprep.mubr.f32.mxu0 0.0
    %1464 = vmatmul.mubr.f32.gmra.mxu0 %v1397
    %v1465 = vpop.f32.mrf.mxu0
    %v1466 = vadd.f32 %v965, %v1465
    %v1467 = vpop.f32.mrf.mxu0
    %1468 = vdwg.mxu0
    %v1469 = vtanh.pop %v1466
    %v1471 = vsel %vm213, %v1469, 0
    %1473 = vmatprep.subr.mxu0 0.0
    %1474 = vmatpush1.msra.mxu0 0.0
    %1475 = vmatprep.subr.mxu0 0.0
    %1476 = vmatpush1.msra.mxu0 0.0
    %1477 = vmatprep.subr.mxu0 0.0
    %1478 = vmatpush1.msra.mxu0 0.0
    %1479 = vmatprep.subr.mxu0 0.0
    %1480 = vmatpush1.msra.mxu0 0.0
    %1481 = vmatprep.subr.mxu0 0.0
    %1482 = vmatpush1.msra.mxu0 0.0
    %1483 = vmatprep.subr.mxu0 0.0
    %1484 = vmatpush1.msra.mxu0 0.0
    %1485 = vmatprep.subr.mxu0 0.0
    %1486 = vmatpush1.msra.mxu0 0.0
    %1487 = vmatprep.subr.mxu0 0.0
    %1488 = vmatpush1.msra.mxu0 0.0
    %1489 = vmatprep.subr.mxu0 0.0
    %1490 = vmatpush1.msra.mxu0 0.0
    %1491 = vmatprep.subr.mxu0 0.0
    %1492 = vmatpush1.msra.mxu0 0.0
    %1493 = vmatprep.subr.mxu0 0.0
    %1494 = vmatpush1.msra.mxu0 0.0
    %1495 = vmatprep.subr.mxu0 0.0
    %1496 = vmatpush1.msra.mxu0 0.0
    %1497 = vmatprep.subr.mxu0 0.0
    %1498 = vmatpush1.msra.mxu0 %v750
    %1499 = vmatprep.subr.mxu0 0.0
    %1500 = vmatpush1.msra.mxu0 %v749
    %1501 = vmatprep.subr.mxu0 0.0
    %1502 = vmatpush1.msra.mxu0 %v748
    %1503 = vmatprep.subr.mxu0 0.0
    %1504 = vmatpush1.msra.mxu0 %v747
    %1505 = vmatprep.subr.mxu0 0.0
    %1506 = vmatpush2.msra.mxu0 0.0
    %1507 = vmatprep.subr.mxu0 0.0
    %1508 = vmatpush2.msra.mxu0 0.0
    %1509 = vmatprep.subr.mxu0 0.0
    %1510 = vmatpush2.msra.mxu0 0.0
    %1511 = vmatprep.subr.mxu0 0.0
    %1512 = vmatpush2.msra.mxu0 0.0
    %1513 = vmatprep.subr.mxu0 0.0
    %1514 = vmatpush2.msra.mxu0 0.0
    %1515 = vmatprep.subr.mxu0 0.0
    %1516 = vmatpush2.msra.mxu0 0.0
    %1517 = vmatprep.subr.mxu0 0.0
    %1518 = vmatpush2.msra.mxu0 0.0
    %1519 = vmatprep.subr.mxu0 0.0
    %1520 = vmatpush2.msra.mxu0 0.0
    %1521 = vmatprep.subr.mxu0 0.0
    %1522 = vmatpush2.msra.mxu0 0.0
    %1523 = vmatprep.subr.mxu0 0.0
    %1524 = vmatpush2.msra.mxu0 0.0
    %1525 = vmatprep.subr.mxu0 0.0
    %1526 = vmatpush2.msra.mxu0 0.0
    %1527 = vmatprep.subr.mxu0 0.0
    %1528 = vmatpush2.msra.mxu0 0.0
    %1529 = vmatprep.subr.mxu0 0.0
    %1530 = vmatpush2.msra.mxu0 0.0
    %1531 = vmatprep.subr.mxu0 0.0
    %1532 = vmatpush2.msra.mxu0 0.0
    %1533 = vmatprep.subr.mxu0 0.0
    %1534 = vmatpush2.msra.mxu0 0.0
    %1535 = vmatprep.subr.mxu0 0.0
    %1536 = vmatpush2.msra.mxu0 0.0
    %1537 = vmatprep.mubr.f32.mxu0 0.0
    %1538 = vmatmul.mubr.f32.gmra.mxu0 %v1471
    %v1539 = vpop.f32.mrf.mxu0
    %v1540 = vadd.f32 %v1035, %v1539
    %v1541 = vpop.f32.mrf.mxu0
    %1542 = vdwg.mxu0
    %v1543 = vtanh.pop %v1540
    %v1545 = vsel %vm213, %v1543, 0
    %1547 = vmatprep.subr.mxu0 0.0
    %1548 = vmatpush1.msra.mxu0 0.0
    %1549 = vmatprep.subr.mxu0 0.0
    %1550 = vmatpush1.msra.mxu0 0.0
    %1551 = vmatprep.subr.mxu0 0.0
    %1552 = vmatpush1.msra.mxu0 0.0
    %1553 = vmatprep.subr.mxu0 0.0
    %1554 = vmatpush1.msra.mxu0 0.0
    %1555 = vmatprep.subr.mxu0 0.0
    %1556 = vmatpush1.msra.mxu0 0.0
    %1557 = vmatprep.subr.mxu0 0.0
    %1558 = vmatpush1.msra.mxu0 0.0
    %1559 = vmatprep.subr.mxu0 0.0
    %1560 = vmatpush1.msra.mxu0 0.0
    %1561 = vmatprep.subr.mxu0 0.0
    %1562 = vmatpush1.msra.mxu0 0.0
    %1563 = vmatprep.subr.mxu0 0.0
    %1564 = vmatpush1.msra.mxu0 0.0
    %1565 = vmatprep.subr.mxu0 0.0
    %1566 = vmatpush1.msra.mxu0 0.0
    %1567 = vmatprep.subr.mxu0 0.0
    %1568 = vmatpush1.msra.mxu0 0.0
    %1569 = vmatprep.subr.mxu0 0.0
    %1570 = vmatpush1.msra.mxu0 0.0
    %1571 = vmatprep.subr.mxu0 0.0
    %1572 = vmatpush1.msra.mxu0 %v750
    %1573 = vmatprep.subr.mxu0 0.0
    %1574 = vmatpush1.msra.mxu0 %v749
    %1575 = vmatprep.subr.mxu0 0.0
    %1576 = vmatpush1.msra.mxu0 %v748
    %1577 = vmatprep.subr.mxu0 0.0
    %1578 = vmatpush1.msra.mxu0 %v747
    %1579 = vmatprep.subr.mxu0 0.0
    %1580 = vmatpush2.msra.mxu0 0.0
    %1581 = vmatprep.subr.mxu0 0.0
    %1582 = vmatpush2.msra.mxu0 0.0
    %1583 = vmatprep.subr.mxu0 0.0
    %1584 = vmatpush2.msra.mxu0 0.0
    %1585 = vmatprep.subr.mxu0 0.0
    %1586 = vmatpush2.msra.mxu0 0.0
    %1587 = vmatprep.subr.mxu0 0.0
    %1588 = vmatpush2.msra.mxu0 0.0
    %1589 = vmatprep.subr.mxu0 0.0
    %1590 = vmatpush2.msra.mxu0 0.0
    %1591 = vmatprep.subr.mxu0 0.0
    %1592 = vmatpush2.msra.mxu0 0.0
    %1593 = vmatprep.subr.mxu0 0.0
    %1594 = vmatpush2.msra.mxu0 0.0
    %1595 = vmatprep.subr.mxu0 0.0
    %1596 = vmatpush2.msra.mxu0 0.0
    %1597 = vmatprep.subr.mxu0 0.0
    %1598 = vmatpush2.msra.mxu0 0.0
    %1599 = vmatprep.subr.mxu0 0.0
    %1600 = vmatpush2.msra.mxu0 0.0
    %1601 = vmatprep.subr.mxu0 0.0
    %1602 = vmatpush2.msra.mxu0 0.0
    %1603 = vmatprep.subr.mxu0 0.0
    %1604 = vmatpush2.msra.mxu0 0.0
    %1605 = vmatprep.subr.mxu0 0.0
    %1606 = vmatpush2.msra.mxu0 0.0
    %1607 = vmatprep.subr.mxu0 0.0
    %1608 = vmatpush2.msra.mxu0 0.0
    %1609 = vmatprep.subr.mxu0 0.0
    %1610 = vmatpush2.msra.mxu0 0.0
    %1611 = vmatprep.mubr.f32.mxu0 0.0
    %1612 = vmatmul.mubr.f32.gmra.mxu0 %v1545
    %v1613 = vpop.f32.mrf.mxu0
    %v1614 = vadd.f32 %v1105, %v1613
    %v1615 = vpop.f32.mrf.mxu0
    %1616 = vdwg.mxu0
    %v1617 = vtanh.pop %v1614
    %v1619 = vsel %vm213, %v1617, 0
    %1621 = vmatprep.subr.mxu0 0.0
    %1622 = vmatpush1.msra.mxu0 0.0
    %1623 = vmatprep.subr.mxu0 0.0
    %1624 = vmatpush1.msra.mxu0 0.0
    %1625 = vmatprep.subr.mxu0 0.0
    %1626 = vmatpush1.msra.mxu0 0.0
    %1627 = vmatprep.subr.mxu0 0.0
    %1628 = vmatpush1.msra.mxu0 0.0
    %1629 = vmatprep.subr.mxu0 0.0
    %1630 = vmatpush1.msra.mxu0 0.0
    %1631 = vmatprep.subr.mxu0 0.0
    %1632 = vmatpush1.msra.mxu0 0.0
    %1633 = vmatprep.subr.mxu0 0.0
    %1634 = vmatpush1.msra.mxu0 0.0
    %1635 = vmatprep.subr.mxu0 0.0
    %1636 = vmatpush1.msra.mxu0 0.0
    %1637 = vmatprep.subr.mxu0 0.0
    %1638 = vmatpush1.msra.mxu0 0.0
    %1639 = vmatprep.subr.mxu0 0.0
    %1640 = vmatpush1.msra.mxu0 0.0
    %1641 = vmatprep.subr.mxu0 0.0
    %1642 = vmatpush1.msra.mxu0 0.0
    %1643 = vmatprep.subr.mxu0 0.0
    %1644 = vmatpush1.msra.mxu0 0.0
    %1645 = vmatprep.subr.mxu0 0.0
    %1646 = vmatpush1.msra.mxu0 %v750
    %1647 = vmatprep.subr.mxu0 0.0
    %1648 = vmatpush1.msra.mxu0 %v749
    %1649 = vmatprep.subr.mxu0 0.0
    %1650 = vmatpush1.msra.mxu0 %v748
    %1651 = vmatprep.subr.mxu0 0.0
    %1652 = vmatpush1.msra.mxu0 %v747
    %1653 = vmatprep.subr.mxu0 0.0
    %1654 = vmatpush2.msra.mxu0 0.0
    %1655 = vmatprep.subr.mxu0 0.0
    %1656 = vmatpush2.msra.mxu0 0.0
    %1657 = vmatprep.subr.mxu0 0.0
    %1658 = vmatpush2.msra.mxu0 0.0
    %1659 = vmatprep.subr.mxu0 0.0
    %1660 = vmatpush2.msra.mxu0 0.0
    %1661 = vmatprep.subr.mxu0 0.0
    %1662 = vmatpush2.msra.mxu0 0.0
    %1663 = vmatprep.subr.mxu0 0.0
    %1664 = vmatpush2.msra.mxu0 0.0
    %1665 = vmatprep.subr.mxu0 0.0
    %1666 = vmatpush2.msra.mxu0 0.0
    %1667 = vmatprep.subr.mxu0 0.0
    %1668 = vmatpush2.msra.mxu0 0.0
    %1669 = vmatprep.subr.mxu0 0.0
    %1670 = vmatpush2.msra.mxu0 0.0
    %1671 = vmatprep.subr.mxu0 0.0
    %1672 = vmatpush2.msra.mxu0 0.0
    %1673 = vmatprep.subr.mxu0 0.0
    %1674 = vmatpush2.msra.mxu0 0.0
    %1675 = vmatprep.subr.mxu0 0.0
    %1676 = vmatpush2.msra.mxu0 0.0
    %1677 = vmatprep.subr.mxu0 0.0
    %1678 = vmatpush2.msra.mxu0 0.0
    %1679 = vmatprep.subr.mxu0 0.0
    %1680 = vmatpush2.msra.mxu0 0.0
    %1681 = vmatprep.subr.mxu0 0.0
    %1682 = vmatpush2.msra.mxu0 0.0
    %1683 = vmatprep.subr.mxu0 0.0
    %1684 = vmatpush2.msra.mxu0 0.0
    %1685 = vmatprep.mubr.f32.mxu0 0.0
    %1686 = vmatmul.mubr.f32.gmra.mxu0 %v1619
    %v1687 = vpop.f32.mrf.mxu0
    %v1688 = vadd.f32 %v1175, %v1687
    %v1689 = vpop.f32.mrf.mxu0
    %1690 = vdwg.mxu0
    %v1691 = vtanh.pop %v1688
    %v1693 = vsel %vm213, %v1691, 0
    %1695 = vmatprep.subr.mxu0 0.0
    %1696 = vmatpush1.msra.mxu0 0.0
    %1697 = vmatprep.subr.mxu0 0.0
    %1698 = vmatpush1.msra.mxu0 0.0
    %1699 = vmatprep.subr.mxu0 0.0
    %1700 = vmatpush1.msra.mxu0 0.0
    %1701 = vmatprep.subr.mxu0 0.0
    %1702 = vmatpush1.msra.mxu0 0.0
    %1703 = vmatprep.subr.mxu0 0.0
    %1704 = vmatpush1.msra.mxu0 0.0
    %1705 = vmatprep.subr.mxu0 0.0
    %1706 = vmatpush1.msra.mxu0 0.0
    %1707 = vmatprep.subr.mxu0 0.0
    %1708 = vmatpush1.msra.mxu0 0.0
    %1709 = vmatprep.subr.mxu0 0.0
    %1710 = vmatpush1.msra.mxu0 0.0
    %1711 = vmatprep.subr.mxu0 0.0
    %1712 = vmatpush1.msra.mxu0 0.0
    %1713 = vmatprep.subr.mxu0 0.0
    %1714 = vmatpush1.msra.mxu0 0.0
    %1715 = vmatprep.subr.mxu0 0.0
    %1716 = vmatpush1.msra.mxu0 0.0
    %1717 = vmatprep.subr.mxu0 0.0
    %1718 = vmatpush1.msra.mxu0 0.0
    %1719 = vmatprep.subr.mxu0 0.0
    %1720 = vmatpush1.msra.mxu0 %v750
    %1721 = vmatprep.subr.mxu0 0.0
    %1722 = vmatpush1.msra.mxu0 %v749
    %1723 = vmatprep.subr.mxu0 0.0
    %1724 = vmatpush1.msra.mxu0 %v748
    %1725 = vmatprep.subr.mxu0 0.0
    %1726 = vmatpush1.msra.mxu0 %v747
    %1727 = vmatprep.subr.mxu0 0.0
    %1728 = vmatpush2.msra.mxu0 0.0
    %1729 = vmatprep.subr.mxu0 0.0
    %1730 = vmatpush2.msra.mxu0 0.0
    %1731 = vmatprep.subr.mxu0 0.0
    %1732 = vmatpush2.msra.mxu0 0.0
    %1733 = vmatprep.subr.mxu0 0.0
    %1734 = vmatpush2.msra.mxu0 0.0
    %1735 = vmatprep.subr.mxu0 0.0
    %1736 = vmatpush2.msra.mxu0 0.0
    %1737 = vmatprep.subr.mxu0 0.0
    %1738 = vmatpush2.msra.mxu0 0.0
    %1739 = vmatprep.subr.mxu0 0.0
    %1740 = vmatpush2.msra.mxu0 0.0
    %1741 = vmatprep.subr.mxu0 0.0
    %1742 = vmatpush2.msra.mxu0 0.0
    %1743 = vmatprep.subr.mxu0 0.0
    %1744 = vmatpush2.msra.mxu0 0.0
    %1745 = vmatprep.subr.mxu0 0.0
    %1746 = vmatpush2.msra.mxu0 0.0
    %1747 = vmatprep.subr.mxu0 0.0
    %1748 = vmatpush2.msra.mxu0 0.0
    %1749 = vmatprep.subr.mxu0 0.0
    %1750 = vmatpush2.msra.mxu0 0.0
    %1751 = vmatprep.subr.mxu0 0.0
    %1752 = vmatpush2.msra.mxu0 0.0
    %1753 = vmatprep.subr.mxu0 0.0
    %1754 = vmatpush2.msra.mxu0 0.0
    %1755 = vmatprep.subr.mxu0 0.0
    %1756 = vmatpush2.msra.mxu0 0.0
    %1757 = vmatprep.subr.mxu0 0.0
    %1758 = vmatpush2.msra.mxu0 0.0
    %1759 = vmatprep.mubr.f32.mxu0 0.0
    %1760 = vmatmul.mubr.f32.gmra.mxu0 %v1693
    %v1761 = vpop.f32.mrf.mxu0
    %v1762 = vadd.f32 %v1245, %v1761
    %v1763 = vpop.f32.mrf.mxu0
    %1764 = vdwg.mxu0
    %v1765 = vtanh.pop %v1762
    %v1767 = vsel %vm213, %v1765, 0
    %1769 = vmatprep.subr.mxu0 0.0
    %1770 = vmatpush1.msra.mxu0 0.0
    %1771 = vmatprep.subr.mxu0 0.0
    %1772 = vmatpush1.msra.mxu0 0.0
    %1773 = vmatprep.subr.mxu0 0.0
    %1774 = vmatpush1.msra.mxu0 0.0
    %1775 = vmatprep.subr.mxu0 0.0
    %1776 = vmatpush1.msra.mxu0 0.0
    %1777 = vmatprep.subr.mxu0 0.0
    %1778 = vmatpush1.msra.mxu0 0.0
    %1779 = vmatprep.subr.mxu0 0.0
    %1780 = vmatpush1.msra.mxu0 0.0
    %1781 = vmatprep.subr.mxu0 0.0
    %1782 = vmatpush1.msra.mxu0 0.0
    %1783 = vmatprep.subr.mxu0 0.0
    %1784 = vmatpush1.msra.mxu0 0.0
    %1785 = vmatprep.subr.mxu0 0.0
    %1786 = vmatpush1.msra.mxu0 0.0
    %1787 = vmatprep.subr.mxu0 0.0
    %1788 = vmatpush1.msra.mxu0 0.0
    %1789 = vmatprep.subr.mxu0 0.0
    %1790 = vmatpush1.msra.mxu0 0.0
    %1791 = vmatprep.subr.mxu0 0.0
    %1792 = vmatpush1.msra.mxu0 0.0
    %1793 = vmatprep.subr.mxu0 0.0
    %1794 = vmatpush1.msra.mxu0 %v750
    %1795 = vmatprep.subr.mxu0 0.0
    %1796 = vmatpush1.msra.mxu0 %v749
    %1797 = vmatprep.subr.mxu0 0.0
    %1798 = vmatpush1.msra.mxu0 %v748
    %1799 = vmatprep.subr.mxu0 0.0
    %1800 = vmatpush1.msra.mxu0 %v747
    %1801 = vmatprep.subr.mxu0 0.0
    %1802 = vmatpush2.msra.mxu0 0.0
    %1803 = vmatprep.subr.mxu0 0.0
    %1804 = vmatpush2.msra.mxu0 0.0
    %1805 = vmatprep.subr.mxu0 0.0
    %1806 = vmatpush2.msra.mxu0 0.0
    %1807 = vmatprep.subr.mxu0 0.0
    %1808 = vmatpush2.msra.mxu0 0.0
    %1809 = vmatprep.subr.mxu0 0.0
    %1810 = vmatpush2.msra.mxu0 0.0
    %1811 = vmatprep.subr.mxu0 0.0
    %1812 = vmatpush2.msra.mxu0 0.0
    %1813 = vmatprep.subr.mxu0 0.0
    %1814 = vmatpush2.msra.mxu0 0.0
    %1815 = vmatprep.subr.mxu0 0.0
    %1816 = vmatpush2.msra.mxu0 0.0
    %1817 = vmatprep.subr.mxu0 0.0
    %1818 = vmatpush2.msra.mxu0 0.0
    %1819 = vmatprep.subr.mxu0 0.0
    %1820 = vmatpush2.msra.mxu0 0.0
    %1821 = vmatprep.subr.mxu0 0.0
    %1822 = vmatpush2.msra.mxu0 0.0
    %1823 = vmatprep.subr.mxu0 0.0
    %1824 = vmatpush2.msra.mxu0 0.0
    %1825 = vmatprep.subr.mxu0 0.0
    %1826 = vmatpush2.msra.mxu0 0.0
    %1827 = vmatprep.subr.mxu0 0.0
    %1828 = vmatpush2.msra.mxu0 0.0
    %1829 = vmatprep.subr.mxu0 0.0
    %1830 = vmatpush2.msra.mxu0 0.0
    %1831 = vmatprep.subr.mxu0 0.0
    %1832 = vmatpush2.msra.mxu0 0.0
    %1833 = vmatprep.mubr.f32.mxu0 0.0
    %1834 = vmatmul.mubr.f32.gmra.mxu0 %v1767
    %v1835 = vpop.f32.mrf.mxu0
    %v1836 = vadd.f32 %v1318, %v1835
    %v1837 = vpop.f32.mrf.mxu0
    %1838 = vdwg.mxu0
    %v1839 = vtanh.pop %v1836
    %v1840 = vld [vmem:[%s7] sm:$0xff]
    %v1841 = vld [vmem:[%s7 + $0x8] sm:$0xff]
    %v1842 = vld [vmem:[%s7 + $0x10] sm:$0xff]
    %v1843 = vld [vmem:[%s7 + $0x18] sm:$0xff]
    %v1844 = vld [vmem:[%s8] sm:$0x1]
    %v1846 = vlaneseq
    %v1847 = vshrl.u32 %v1846, 7
    %v1848 = vsub.s32 0, %v1847
    %v1849 = vrot.slane %v1844, %v1848
    %v1852 = vsel %vm213, %v1839, 0
    %1854 = vmatprep.subr.mxu0 0.0
    %1855 = vmatpush1.msra.mxu0 0.0
    %1856 = vmatprep.subr.mxu0 0.0
    %1857 = vmatpush1.msra.mxu0 0.0
    %1858 = vmatprep.subr.mxu0 0.0
    %1859 = vmatpush1.msra.mxu0 0.0
    %1860 = vmatprep.subr.mxu0 0.0
    %1861 = vmatpush1.msra.mxu0 0.0
    %1862 = vmatprep.subr.mxu0 0.0
    %1863 = vmatpush1.msra.mxu0 0.0
    %1864 = vmatprep.subr.mxu0 0.0
    %1865 = vmatpush1.msra.mxu0 0.0
    %1866 = vmatprep.subr.mxu0 0.0
    %1867 = vmatpush1.msra.mxu0 0.0
    %1868 = vmatprep.subr.mxu0 0.0
    %1869 = vmatpush1.msra.mxu0 0.0
    %1870 = vmatprep.subr.mxu0 0.0
    %1871 = vmatpush1.msra.mxu0 0.0
    %1872 = vmatprep.subr.mxu0 0.0
    %1873 = vmatpush1.msra.mxu0 0.0
    %1874 = vmatprep.subr.mxu0 0.0
    %1875 = vmatpush1.msra.mxu0 0.0
    %1876 = vmatprep.subr.mxu0 0.0
    %1877 = vmatpush1.msra.mxu0 0.0
    %1878 = vmatprep.subr.mxu0 0.0
    %1879 = vmatpush1.msra.mxu0 %v1843
    %1880 = vmatprep.subr.mxu0 0.0
    %1881 = vmatpush1.msra.mxu0 %v1842
    %1882 = vmatprep.subr.mxu0 0.0
    %1883 = vmatpush1.msra.mxu0 %v1841
    %1884 = vmatprep.subr.mxu0 0.0
    %1885 = vmatpush1.msra.mxu0 %v1840
    %1886 = vmatprep.subr.mxu0 0.0
    %1887 = vmatpush2.msra.mxu0 0.0
    %1888 = vmatprep.subr.mxu0 0.0
    %1889 = vmatpush2.msra.mxu0 0.0
    %1890 = vmatprep.subr.mxu0 0.0
    %1891 = vmatpush2.msra.mxu0 0.0
    %1892 = vmatprep.subr.mxu0 0.0
    %1893 = vmatpush2.msra.mxu0 0.0
    %1894 = vmatprep.subr.mxu0 0.0
    %1895 = vmatpush2.msra.mxu0 0.0
    %1896 = vmatprep.subr.mxu0 0.0
    %1897 = vmatpush2.msra.mxu0 0.0
    %1898 = vmatprep.subr.mxu0 0.0
    %1899 = vmatpush2.msra.mxu0 0.0
    %1900 = vmatprep.subr.mxu0 0.0
    %1901 = vmatpush2.msra.mxu0 0.0
    %1902 = vmatprep.subr.mxu0 0.0
    %1903 = vmatpush2.msra.mxu0 0.0
    %1904 = vmatprep.subr.mxu0 0.0
    %1905 = vmatpush2.msra.mxu0 0.0
    %1906 = vmatprep.subr.mxu0 0.0
    %1907 = vmatpush2.msra.mxu0 0.0
    %1908 = vmatprep.subr.mxu0 0.0
    %1909 = vmatpush2.msra.mxu0 0.0
    %1910 = vmatprep.subr.mxu0 0.0
    %1911 = vmatpush2.msra.mxu0 0.0
    %1912 = vmatprep.subr.mxu0 0.0
    %1913 = vmatpush2.msra.mxu0 0.0
    %1914 = vmatprep.subr.mxu0 0.0
    %1915 = vmatpush2.msra.mxu0 0.0
    %1916 = vmatprep.subr.mxu0 0.0
    %1917 = vmatpush2.msra.mxu0 0.0
    %1918 = vmatprep.mubr.f32.mxu0 0.0
    %1919 = vmatmul.mubr.f32.gmra.mxu0 %v1852
    %v1920 = vpop.f32.mrf.mxu0
    %v1921 = vadd.f32 %v1849, %v1920
    %v1922 = vpop.f32.mrf.mxu0
    %1923 = vdwg.mxu0
    %1924 = vst [vmem:[#allocation13] sm:$0x3] %v1921
    // Predicated region
    $region62: #{tpu_custom_call.1} parent=1 // pred_check
      _
    $region63: #{tpu_custom_call.1} parent=1 // pred_check_branch
      %1926 = sbr.rel (0) target = $region65
    $region64: #{tpu_custom_call.1} parent=1 // pred_region
      %s1928 = ssub.s32 32, 32
      %1929 = vsyncadd [#allocation4], %s1928
      %s1931 = sshll.u32 [#allocation13], 4
      %s1932 = int_to_ptr.vmem [resolvable:$true] %s1931
      %1934 = dma.vmem_to_hbm [thread:$0]  %s1932, 32, %s9, [#allocation4]
    $region65: #{tpu_custom_call.1} parent=1 // pred_fallthru
      _
    // Predicated region
    $region66: #{tpu_custom_call.1} parent=1 // pred_check
      _
    $region67: #{tpu_custom_call.1} parent=1 // pred_check_branch
      %1936 = sbr.rel (0) target = $region69
    $region68: #{tpu_custom_call.1} parent=1 // pred_region
      %1937 = dma.done [#allocation4], 32
    $region69: #{tpu_custom_call.1} parent=1 // pred_fallthru
      _
    %1938 = vsyncpa [#allocation3], 1
    %1939 = vsyncpa [#allocation6], 1
    %1940 = vsyncpa [#allocation9], 1
    %1941 = vsyncpa [#allocation12], 1
    %1942 = vsyncpa [#allocation4], 1

</llo_original>
